<compile_context>
chip_gen: v7x
topology: tpu7x:2x2x1
jax: 0.10.0
libtpu: 0.0.40
codegen_flags: <defaults>
</compile_context>

<pallas_src>
import functools

import jax
import jax.numpy as jnp
from jax.experimental import pallas as pl
from jax.experimental.pallas import tpu as pltpu


def _round_up(x, m):
    return (x + m - 1) // m * m


# ----------------------------- Pallas kernel --------------------------------
def _conv_bn_relu_kernel(x_ref, w_ref, g_ref, be_ref, msk_ref, o_ref,
                         sum_ref, sq_ref, scale_ref, shift_ref,
                         *, eps, inv_m, mp, owp, c4):
    """Fused conv(4,2,1)-as-shift-matmuls + train-mode BatchNorm + ReLU.

    grid = (2, N): axis 0 = phase (0: batch stats, 1: normalize+write),
                   axis 1 = sample.
      x_ref:   [R2, 4C]   per-sample space-to-depth block (bf16), rows =
                          flattened (i, j) over the (OH+1, OW+1) half-res grid.
      w_ref:   [16C, OC]  conv weights, K order (a, b, e, f, c); VMEM resident.
      g_ref:   [1, OC]    BN gamma (f32);  be_ref: [1, OC] BN beta (f32).
      msk_ref: [MP, 1]    1.0 for valid output rows, 0.0 for the strip-mine
                          garbage column (ow == OW).
      o_ref:   [MP, OC]   per-sample output rows (MP = OH*(OW+1)).
      scratch: per-channel f32 sum, sum-of-squares, folded scale, folded shift.
    """
    phase = pl.program_id(0)
    i = pl.program_id(1)
    n_i = pl.num_programs(1)

    xv = x_ref[...]                                   # [R2, 4C] bf16

    # In-VMEM im2col: the four (a, b) half-pixel shifts are contiguous row
    # windows of xv.  Each shift is one MXU matmul (K = 4C); the matmul runs
    # on the full aligned block and the row shift is applied to the f32
    # result, so every slice is on 32-bit data.
    y = None
    for s, (a, b) in enumerate(((0, 0), (0, 1), (1, 0), (1, 1))):
        w_s = w_ref[pl.ds(s * c4, c4), :]             # [4C, OC], aligned slice
        z = jnp.dot(xv, w_s, preferred_element_type=jnp.float32)   # [R2, OC]
        d = a * owp + b
        part = z[d:d + mp, :]                         # [MP, OC] f32
        y = part if y is None else y + part

    @pl.when(phase == 0)
    def _stats():
        @pl.when(i == 0)
        def _init():
            sum_ref[...] = jnp.zeros_like(sum_ref)
            sq_ref[...] = jnp.zeros_like(sq_ref)

        ym = y * msk_ref[...]                         # drop strip-mine rows
        sum_ref[...] += jnp.sum(ym, axis=0, keepdims=True)
        sq_ref[...] += jnp.sum(ym * ym, axis=0, keepdims=True)

        @pl.when(i == n_i - 1)
        def _finalize():
            mean = sum_ref[...] * inv_m
            # Biased variance (torch BN train mode); clamp guards the
            # E[x^2]-E[x]^2 form against tiny negative round-off.
            var = jnp.maximum(sq_ref[...] * inv_m - mean * mean, 0.0)
            scale = g_ref[...] * jax.lax.rsqrt(var + eps)
            scale_ref[...] = scale
            shift_ref[...] = be_ref[...] - mean * scale

    @pl.when(phase == 1)
    def _apply():
        o_ref[...] = jnp.maximum(y * scale_ref[...] + shift_ref[...],
                                 0.0).astype(o_ref.dtype)


# ------------------------------ layer wrapper --------------------------------
def _weights_for_kernel(w_hwio):
    """[4,4,IC,OC] HWIO -> [16*IC, OC] with K order (a, b, e, f, ic),
    where kh = 2a+e, kw = 2b+f (matches the space-to-depth data order)."""
    kh, kw, ic, oc = w_hwio.shape
    assert kh == 4 and kw == 4
    wr = w_hwio.reshape(2, 2, 2, 2, ic, oc)           # (a, e, b, f, ic, oc)
    wr = jnp.transpose(wr, (0, 2, 1, 3, 4, 5))        # (a, b, e, f, ic, oc)
    return wr.reshape(16 * ic, oc)


def conv_bn_relu(x_nhwc, w_hwio, gamma, beta, *, eps=1e-5,
                 out_dtype=jnp.float32, matmul_dtype=jnp.bfloat16):
    """relu(batchnorm(conv_{k4,s2,p1}(x))) with train-mode batch statistics.

    x_nhwc: [N, H, W, IC]; w_hwio: [4, 4, IC, OC]; gamma/beta: [OC].
    Returns [N, H//2, W//2, OC] in out_dtype.
    """
    n, h, w, ic = x_nhwc.shape
    oc = w_hwio.shape[-1]
    assert w_hwio.shape[:3] == (4, 4, ic)
    assert h % 2 == 0 and w % 2 == 0

    oh, ow = h // 2, w // 2
    ohp, owp = oh + 1, ow + 1
    mp = oh * owp                    # output rows/sample incl. 1 garbage col
    c4 = 4 * ic

    # Space-to-depth (pad=1, parity split): same bytes as the raw activation,
    # ~4x smaller than an im2col patch array; the rest happens in VMEM.
    xq = x_nhwc.astype(matmul_dtype)
    xp = jnp.pad(xq, ((0, 0), (1, 1), (1, 1), (0, 0)))
    xs = xp.reshape(n, ohp, 2, owp, 2, ic).transpose(0, 1, 3, 2, 4, 5)
    xs = xs.reshape(n, ohp * owp, c4)
    r2 = _round_up(ohp * owp + 1, 16)                # +1 halo row, bf16 packing
    xs = jnp.pad(xs, ((0, 0), (0, r2 - ohp * owp), (0, 0)))

    wk = _weights_for_kernel(w_hwio).astype(matmul_dtype)         # [16*IC, OC]
    g = gamma.reshape(1, oc).astype(jnp.float32)
    be = beta.reshape(1, oc).astype(jnp.float32)
    msk = ((jnp.arange(mp) % owp) < ow).astype(jnp.float32).reshape(mp, 1)

    # Conservative, explicit scoped-VMEM budget: 2*estimate, floored at 16 MiB
    # (v5e default) and capped at 48 MiB (headroom on v7x's 64 MiB part).
    itm = jnp.dtype(matmul_dtype).itemsize
    oitm = jnp.dtype(out_dtype).itemsize
    est = (2 * r2 * c4 * itm + 2 * 16 * ic * oc * itm + 2 * mp * 4
           + 4 * oc * 4 + 2 * mp * oc * oitm + 4 * 8 * 128 * 4 + (1 << 20))
    vmem_limit = int(max(16 << 20, min(48 << 20, 2 * est)))

    out = pl.pallas_call(
        functools.partial(_conv_bn_relu_kernel, eps=eps,
                          inv_m=1.0 / (n * oh * ow), mp=mp, owp=owp, c4=c4),
        out_shape=jax.ShapeDtypeStruct((n, mp, oc), out_dtype),
        grid_spec=pltpu.PrefetchScalarGridSpec(
            num_scalar_prefetch=0,
            # (phase, sample); phase outermost so all stats are accumulated
            # before any sample is normalized.
            grid=(2, n),
            in_specs=[
                pl.BlockSpec((None, r2, c4), lambda p, i: (i, 0, 0)),
                pl.BlockSpec((16 * ic, oc), lambda p, i: (0, 0)),  # resident
                pl.BlockSpec((1, oc), lambda p, i: (0, 0)),
                pl.BlockSpec((1, oc), lambda p, i: (0, 0)),
                pl.BlockSpec((mp, 1), lambda p, i: (0, 0)),
            ],
            # Phase 0 parks the (unwritten) output on block 0 -> no HBM
            # write-back traffic during the stats phase.
            out_specs=pl.BlockSpec((None, mp, oc), lambda p, i: (p * i, 0, 0)),
            scratch_shapes=[pltpu.VMEM((1, oc), jnp.float32)] * 4,
        ),
        compiler_params=pltpu.CompilerParams(
            # Both axes "arbitrary": phase revisits output blocks, and the
            # sample axis shares the cross-sample stats accumulators.
            dimension_semantics=("arbitrary", "arbitrary"),
            vmem_limit_bytes=vmem_limit,
        ),
    )(xs, wk, g, be, msk)

    # Drop the strip-mine column and restore [N, OH, OW, OC].
    return out.reshape(n, oh, owp, oc)[:, :, :ow, :]


# ------------------------------- JAX glue ------------------------------------
def patcher_forward(x_nchw, params, *, matmul_dtype=jnp.bfloat16):
    """Patcher.forward equivalent: [N, C, H, W] -> [N, 128, H//4, W//4]."""
    n, c, h, w = x_nchw.shape
    assert h % 4 == 0 and w % 4 == 0, "Patcher expects H, W divisible by 4"
    x = jnp.transpose(x_nchw, (0, 2, 3, 1))           # NHWC
    # TODO(synk): fuse layer 2 (and its space-to-depth) into the layer-1
    # pallas_call so y1 never round-trips through HBM.

    # Layer 1: Conv(C -> 64, k4 s2 p1) + BN + ReLU  (bf16 output, fed directly
    # to layer 2 — no f32 write + XLA re-cast pass).
    y1 = conv_bn_relu(x, params["w1"], params["g1"], params["be1"],
                      out_dtype=matmul_dtype, matmul_dtype=matmul_dtype)

    # Layer 2: Conv(64 -> 128, k4 s2 p1) + BN + ReLU (f32 module output).
    y2 = conv_bn_relu(y1, params["w2"], params["g2"], params["be2"],
                      out_dtype=jnp.float32, matmul_dtype=matmul_dtype)

    return jnp.transpose(y2, (0, 3, 1, 2))            # back to NCHW


def init_params(key, in_channels):
    k1, k2, k3, k4, k5, k6 = jax.random.split(key, 6)
    # Conv weights in HWIO layout.  Conv biases are omitted: train-mode BN
    # mean subtraction cancels them exactly, so the forward is unchanged.
    return {
        "w1": jax.random.normal(k1, (4, 4, in_channels, 64), jnp.float32) * 0.05,
        "g1": 1.0 + 0.1 * jax.random.normal(k3, (64,), jnp.float32),
        "be1": 0.1 * jax.random.normal(k4, (64,), jnp.float32),
        "w2": jax.random.normal(k2, (4, 4, 64, 128), jnp.float32) * 0.02,
        "g2": 1.0 + 0.1 * jax.random.normal(k5, (128,), jnp.float32),
        "be2": 0.1 * jax.random.normal(k6, (128,), jnp.float32),
    }


def _reference_forward(x_nchw, params, eps=1e-5):
    """Pure-JAX f32 reference (lax.conv + batch-stat BN + ReLU)."""
    def layer(x_nhwc, w_hwio, gamma, beta):
        y = jax.lax.conv_general_dilated(
            x_nhwc, w_hwio, window_strides=(2, 2), padding=((1, 1), (1, 1)),
            dimension_numbers=("NHWC", "HWIO", "NHWC"),
            preferred_element_type=jnp.float32,
            precision=jax.lax.Precision.HIGHEST)
        mean = jnp.mean(y, axis=(0, 1, 2), keepdims=True)
        var = jnp.mean((y - mean) ** 2, axis=(0, 1, 2), keepdims=True)
        y = (y - mean) * jax.lax.rsqrt(var + eps)
        y = gamma.reshape(1, 1, 1, -1) * y + beta.reshape(1, 1, 1, -1)
        return jnp.maximum(y, 0.0)

    x = jnp.transpose(x_nchw, (0, 2, 3, 1))
    y1 = layer(x, params["w1"], params["g1"], params["be1"])
    y2 = layer(y1, params["w2"], params["g2"], params["be2"])
    return jnp.transpose(y2, (0, 3, 1, 2))


if __name__ == "__main__":
    key = jax.random.PRNGKey(0)
    kx, kp = jax.random.split(key)

    N, C, H, W = 2, 4, 16, 16
    x = jax.random.normal(kx, (N, C, H, W), jnp.float32)
    params = init_params(kp, C)

    out = jax.jit(patcher_forward)(x, params)
    out = jax.block_until_ready(out)

    assert out.shape == (N, 128, H // 4, W // 4), out.shape
    assert bool(jnp.all(jnp.isfinite(out)))
    assert bool(jnp.all(out >= 0.0))  # ReLU output

    # Loose-tolerance check vs a pure-JAX f32 reference (the kernel runs with
    # bf16 matmul operands and stores layer-1 activations in bf16, so
    # bit-exactness is not expected).
    ref = _reference_forward(x, params)
    max_err = float(jnp.max(jnp.abs(out - ref)))
    assert max_err < 0.12, f"max abs err vs reference: {max_err}"

    print("KERNEL_OK")
</pallas_src>

<mosaic_0001>
module attributes {stable_mosaic.version = 11 : i64} {
  func.func @_conv_bn_relu_kernel(%arg0: i32, %arg1: i32, %arg2: memref<1x96x16xbf16, #tpu.memory_space<vmem>>, %arg3: memref<64x64xbf16, #tpu.memory_space<vmem>>, %arg4: memref<1x64xf32, #tpu.memory_space<vmem>>, %arg5: memref<1x64xf32, #tpu.memory_space<vmem>>, %arg6: memref<72x1xf32, #tpu.memory_space<vmem>>, %arg7: memref<1x72x64xbf16, #tpu.memory_space<vmem>>, %arg8: memref<1x64xf32, #tpu.memory_space<vmem>>, %arg9: memref<1x64xf32, #tpu.memory_space<vmem>>, %arg10: memref<1x64xf32, #tpu.memory_space<vmem>>, %arg11: memref<1x64xf32, #tpu.memory_space<vmem>>) attributes {dimension_semantics = [#tpu.dimension_semantics<arbitrary>, #tpu.dimension_semantics<arbitrary>], iteration_bounds = array<i64: 2, 2>, scalar_prefetch = 0 : i64, scratch_operands = 4 : i64, tpu.core_type = #tpu.core_type<tc>, window_params = [{transform_indices = @transform_0, window_bounds = array<i64: 1, 96, 16>}, {pipeline_mode = #tpu.pipeline_mode<synchronous>, transform_indices = @transform_1, window_bounds = array<i64: 64, 64>}, {pipeline_mode = #tpu.pipeline_mode<synchronous>, transform_indices = @transform_2, window_bounds = array<i64: 1, 64>}, {pipeline_mode = #tpu.pipeline_mode<synchronous>, transform_indices = @transform_3, window_bounds = array<i64: 1, 64>}, {pipeline_mode = #tpu.pipeline_mode<synchronous>, transform_indices = @transform_4, window_bounds = array<i64: 72, 1>}, {transform_indices = @transform_5, window_bounds = array<i64: 1, 72, 64>}]} {
    %c0 = arith.constant 0 : index
    %c0_0 = arith.constant 0 : index
    %c0_1 = arith.constant 0 : index
    %0 = vector.load %arg2[%c0, %c0_0, %c0_1] : memref<1x96x16xbf16, #tpu.memory_space<vmem>>, vector<1x96x16xbf16>
    %1 = vector.shape_cast %0 : vector<1x96x16xbf16> to vector<96x16xbf16>
    %c0_2 = arith.constant 0 : index
    %c0_3 = arith.constant 0 : index
    %2 = vector.load %arg3[%c0_2, %c0_3] : memref<64x64xbf16, #tpu.memory_space<vmem>>, vector<16x64xbf16>
    %cst = arith.constant dense<0.000000e+00> : vector<96x64xf32>
    %3 = tpu.matmul %1, %2, %cst {dimension_numbers = #tpu.dot_dimension_numbers<[1], [0], [0], [1], [0, 0, 1, 1], [], []>} : vector<96x16xbf16>, vector<16x64xbf16>, vector<96x64xf32> -> vector<96x64xf32>
    %4 = vector.extract_strided_slice %3 {offsets = [0, 0], sizes = [72, 64], strides = [1, 1]} : vector<96x64xf32> to vector<72x64xf32>
    %c16 = arith.constant 16 : index
    %c0_4 = arith.constant 0 : index
    %5 = vector.load %arg3[%c16, %c0_4] : memref<64x64xbf16, #tpu.memory_space<vmem>>, vector<16x64xbf16>
    %cst_5 = arith.constant dense<0.000000e+00> : vector<96x64xf32>
    %6 = tpu.matmul %1, %5, %cst_5 {dimension_numbers = #tpu.dot_dimension_numbers<[1], [0], [0], [1], [0, 0, 1, 1], [], []>} : vector<96x16xbf16>, vector<16x64xbf16>, vector<96x64xf32> -> vector<96x64xf32>
    %7 = vector.extract_strided_slice %6 {offsets = [1, 0], sizes = [72, 64], strides = [1, 1]} : vector<96x64xf32> to vector<72x64xf32>
    %8 = arith.addf %4, %7 : vector<72x64xf32>
    %c32 = arith.constant 32 : index
    %c0_6 = arith.constant 0 : index
    %9 = vector.load %arg3[%c32, %c0_6] : memref<64x64xbf16, #tpu.memory_space<vmem>>, vector<16x64xbf16>
    %cst_7 = arith.constant dense<0.000000e+00> : vector<96x64xf32>
    %10 = tpu.matmul %1, %9, %cst_7 {dimension_numbers = #tpu.dot_dimension_numbers<[1], [0], [0], [1], [0, 0, 1, 1], [], []>} : vector<96x16xbf16>, vector<16x64xbf16>, vector<96x64xf32> -> vector<96x64xf32>
    %11 = vector.extract_strided_slice %10 {offsets = [9, 0], sizes = [72, 64], strides = [1, 1]} : vector<96x64xf32> to vector<72x64xf32>
    %12 = arith.addf %8, %11 : vector<72x64xf32>
    %c48 = arith.constant 48 : index
    %c0_8 = arith.constant 0 : index
    %13 = vector.load %arg3[%c48, %c0_8] : memref<64x64xbf16, #tpu.memory_space<vmem>>, vector<16x64xbf16>
    %cst_9 = arith.constant dense<0.000000e+00> : vector<96x64xf32>
    %14 = tpu.matmul %1, %13, %cst_9 {dimension_numbers = #tpu.dot_dimension_numbers<[1], [0], [0], [1], [0, 0, 1, 1], [], []>} : vector<96x16xbf16>, vector<16x64xbf16>, vector<96x64xf32> -> vector<96x64xf32>
    %15 = vector.extract_strided_slice %14 {offsets = [10, 0], sizes = [72, 64], strides = [1, 1]} : vector<96x64xf32> to vector<72x64xf32>
    %16 = arith.addf %12, %15 : vector<72x64xf32>
    %c0_i32 = arith.constant 0 : i32
    %17 = arith.cmpi eq, %arg0, %c0_i32 : i32
    %18 = arith.extui %17 : i1 to i32
    %c0_i32_10 = arith.constant 0 : i32
    %19 = arith.cmpi ne, %18, %c0_i32_10 : i32
    scf.if %19 {
      %c0_i32_12 = arith.constant 0 : i32
      %23 = arith.cmpi eq, %arg1, %c0_i32_12 : i32
      %24 = arith.extui %23 : i1 to i32
      %c0_i32_13 = arith.constant 0 : i32
      %25 = arith.cmpi ne, %24, %c0_i32_13 : i32
      scf.if %25 {
        %cst_28 = arith.constant 0.000000e+00 : f32
        %43 = vector.broadcast %cst_28 : f32 to vector<1x64xf32>
        %c0_29 = arith.constant 0 : index
        %c0_30 = arith.constant 0 : index
        %44 = vector.load %arg8[%c0_29, %c0_30] : memref<1x64xf32, #tpu.memory_space<vmem>>, vector<1x64xf32>
        tpu.vector_store %arg8[%c0_29, %c0_30], %43 {strides = array<i32>} : memref<1x64xf32, #tpu.memory_space<vmem>>, vector<1x64xf32>,
        %cst_31 = arith.constant 0.000000e+00 : f32
        %45 = vector.broadcast %cst_31 : f32 to vector<1x64xf32>
        %c0_32 = arith.constant 0 : index
        %c0_33 = arith.constant 0 : index
        %46 = vector.load %arg9[%c0_32, %c0_33] : memref<1x64xf32, #tpu.memory_space<vmem>>, vector<1x64xf32>
        tpu.vector_store %arg9[%c0_32, %c0_33], %45 {strides = array<i32>} : memref<1x64xf32, #tpu.memory_space<vmem>>, vector<1x64xf32>,
      } else {
      }
      %c0_14 = arith.constant 0 : index
      %c0_15 = arith.constant 0 : index
      %26 = vector.load %arg6[%c0_14, %c0_15] : memref<72x1xf32, #tpu.memory_space<vmem>>, vector<72x1xf32>
      %27 = vector.broadcast %26 : vector<72x1xf32> to vector<72x64xf32>
      %28 = arith.mulf %16, %27 : vector<72x64xf32>
      %c0_16 = arith.constant 0 : index
      %c0_17 = arith.constant 0 : index
      %29 = vector.load %arg8[%c0_16, %c0_17] : memref<1x64xf32, #tpu.memory_space<vmem>>, vector<1x64xf32>
      %cst_18 = arith.constant dense<0.000000e+00> : vector<64xf32>
      %30 = vector.multi_reduction <add>, %28, %cst_18 [0] : vector<72x64xf32> to vector<64xf32>
      %31 = vector.shape_cast %30 : vector<64xf32> to vector<1x64xf32>
      %32 = arith.addf %29, %31 : vector<1x64xf32>
      %c0_19 = arith.constant 0 : index
      %c0_20 = arith.constant 0 : index
      %33 = vector.load %arg8[%c0_19, %c0_20] : memref<1x64xf32, #tpu.memory_space<vmem>>, vector<1x64xf32>
      tpu.vector_store %arg8[%c0_19, %c0_20], %32 {strides = array<i32>} : memref<1x64xf32, #tpu.memory_space<vmem>>, vector<1x64xf32>,
      %c0_21 = arith.constant 0 : index
      %c0_22 = arith.constant 0 : index
      %34 = vector.load %arg9[%c0_21, %c0_22] : memref<1x64xf32, #tpu.memory_space<vmem>>, vector<1x64xf32>
      %35 = arith.mulf %28, %28 : vector<72x64xf32>
      %cst_23 = arith.constant dense<0.000000e+00> : vector<64xf32>
      %36 = vector.multi_reduction <add>, %35, %cst_23 [0] : vector<72x64xf32> to vector<64xf32>
      %37 = vector.shape_cast %36 : vector<64xf32> to vector<1x64xf32>
      %38 = arith.addf %34, %37 : vector<1x64xf32>
      %c0_24 = arith.constant 0 : index
      %c0_25 = arith.constant 0 : index
      %39 = vector.load %arg9[%c0_24, %c0_25] : memref<1x64xf32, #tpu.memory_space<vmem>>, vector<1x64xf32>
      tpu.vector_store %arg9[%c0_24, %c0_25], %38 {strides = array<i32>} : memref<1x64xf32, #tpu.memory_space<vmem>>, vector<1x64xf32>,
      %c1_i32_26 = arith.constant 1 : i32
      %40 = arith.cmpi eq, %arg1, %c1_i32_26 : i32
      %41 = arith.extui %40 : i1 to i32
      %c0_i32_27 = arith.constant 0 : i32
      %42 = arith.cmpi ne, %41, %c0_i32_27 : i32
      scf.if %42 {
        %c0_28 = arith.constant 0 : index
        %c0_29 = arith.constant 0 : index
        %43 = vector.load %arg8[%c0_28, %c0_29] : memref<1x64xf32, #tpu.memory_space<vmem>>, vector<1x64xf32>
        %cst_30 = arith.constant 7.812500e-03 : f32
        %44 = vector.broadcast %cst_30 : f32 to vector<1x64xf32>
        %45 = arith.mulf %43, %44 : vector<1x64xf32>
        %c0_31 = arith.constant 0 : index
        %c0_32 = arith.constant 0 : index
        %46 = vector.load %arg9[%c0_31, %c0_32] : memref<1x64xf32, #tpu.memory_space<vmem>>, vector<1x64xf32>
        %cst_33 = arith.constant 7.812500e-03 : f32
        %47 = vector.broadcast %cst_33 : f32 to vector<1x64xf32>
        %48 = arith.mulf %46, %47 : vector<1x64xf32>
        %49 = arith.mulf %45, %45 : vector<1x64xf32>
        %50 = arith.subf %48, %49 : vector<1x64xf32>
        %cst_34 = arith.constant 0.000000e+00 : f32
        %51 = vector.broadcast %cst_34 : f32 to vector<1x64xf32>
        %52 = arith.maximumf %50, %51 : vector<1x64xf32>
        %c0_35 = arith.constant 0 : index
        %c0_36 = arith.constant 0 : index
        %53 = vector.load %arg4[%c0_35, %c0_36] : memref<1x64xf32, #tpu.memory_space<vmem>>, vector<1x64xf32>
        %cst_37 = arith.constant 9.99999974E-6 : f32
        %54 = vector.broadcast %cst_37 : f32 to vector<1x64xf32>
        %55 = arith.addf %52, %54 : vector<1x64xf32>
        %56 = math.rsqrt %55 : vector<1x64xf32>
        %57 = arith.mulf %53, %56 : vector<1x64xf32>
        %c0_38 = arith.constant 0 : index
        %c0_39 = arith.constant 0 : index
        %58 = vector.load %arg10[%c0_38, %c0_39] : memref<1x64xf32, #tpu.memory_space<vmem>>, vector<1x64xf32>
        tpu.vector_store %arg10[%c0_38, %c0_39], %57 {strides = array<i32>} : memref<1x64xf32, #tpu.memory_space<vmem>>, vector<1x64xf32>,
        %c0_40 = arith.constant 0 : index
        %c0_41 = arith.constant 0 : index
        %59 = vector.load %arg5[%c0_40, %c0_41] : memref<1x64xf32, #tpu.memory_space<vmem>>, vector<1x64xf32>
        %60 = arith.mulf %45, %57 : vector<1x64xf32>
        %61 = arith.subf %59, %60 : vector<1x64xf32>
        %c0_42 = arith.constant 0 : index
        %c0_43 = arith.constant 0 : index
        %62 = vector.load %arg11[%c0_42, %c0_43] : memref<1x64xf32, #tpu.memory_space<vmem>>, vector<1x64xf32>
        tpu.vector_store %arg11[%c0_42, %c0_43], %61 {strides = array<i32>} : memref<1x64xf32, #tpu.memory_space<vmem>>, vector<1x64xf32>,
      } else {
      }
    } else {
    }
    %c1_i32 = arith.constant 1 : i32
    %20 = arith.cmpi eq, %arg0, %c1_i32 : i32
    %21 = arith.extui %20 : i1 to i32
    %c0_i32_11 = arith.constant 0 : i32
    %22 = arith.cmpi ne, %21, %c0_i32_11 : i32
    scf.if %22 {
      %c0_12 = arith.constant 0 : index
      %c0_13 = arith.constant 0 : index
      %23 = vector.load %arg10[%c0_12, %c0_13] : memref<1x64xf32, #tpu.memory_space<vmem>>, vector<1x64xf32>
      %24 = vector.broadcast %23 : vector<1x64xf32> to vector<72x64xf32>
      %25 = arith.mulf %16, %24 : vector<72x64xf32>
      %c0_14 = arith.constant 0 : index
      %c0_15 = arith.constant 0 : index
      %26 = vector.load %arg11[%c0_14, %c0_15] : memref<1x64xf32, #tpu.memory_space<vmem>>, vector<1x64xf32>
      %27 = vector.broadcast %26 : vector<1x64xf32> to vector<72x64xf32>
      %28 = arith.addf %25, %27 : vector<72x64xf32>
      %cst_16 = arith.constant 0.000000e+00 : f32
      %29 = vector.broadcast %cst_16 : f32 to vector<72x64xf32>
      %30 = arith.maximumf %28, %29 : vector<72x64xf32>
      %31 = arith.truncf %30 : vector<72x64xf32> to vector<72x64xbf16>
      %c0_17 = arith.constant 0 : index
      %c0_18 = arith.constant 0 : index
      %c0_19 = arith.constant 0 : index
      %32 = vector.load %arg7[%c0_17, %c0_18, %c0_19] : memref<1x72x64xbf16, #tpu.memory_space<vmem>>, vector<1x72x64xbf16>
      %33 = vector.shape_cast %32 : vector<1x72x64xbf16> to vector<72x64xbf16>
      %34 = vector.shape_cast %31 : vector<72x64xbf16> to vector<1x72x64xbf16>
      tpu.vector_store %arg7[%c0_17, %c0_18, %c0_19], %34 {strides = array<i32>} : memref<1x72x64xbf16, #tpu.memory_space<vmem>>, vector<1x72x64xbf16>,
    } else {
    }
    return
  }
  func.func @transform_0(%arg0: i32, %arg1: i32) -> (i32, i32, i32) {
    %c0_i32 = arith.constant 0 : i32
    %c0_i32_0 = arith.constant 0 : i32
    %c0_i32_1 = arith.constant 0 : i32
    return %arg1, %c0_i32, %c0_i32_0 : i32, i32, i32
  }
  func.func @transform_1(%arg0: i32, %arg1: i32) -> (i32, i32) {
    %c0_i32 = arith.constant 0 : i32
    %c0_i32_0 = arith.constant 0 : i32
    %c0_i32_1 = arith.constant 0 : i32
    return %c0_i32, %c0_i32_0 : i32, i32
  }
  func.func @transform_2(%arg0: i32, %arg1: i32) -> (i32, i32) {
    %c0_i32 = arith.constant 0 : i32
    %c0_i32_0 = arith.constant 0 : i32
    %c0_i32_1 = arith.constant 0 : i32
    return %c0_i32, %c0_i32_0 : i32, i32
  }
  func.func @transform_3(%arg0: i32, %arg1: i32) -> (i32, i32) {
    %c0_i32 = arith.constant 0 : i32
    %c0_i32_0 = arith.constant 0 : i32
    %c0_i32_1 = arith.constant 0 : i32
    return %c0_i32, %c0_i32_0 : i32, i32
  }
  func.func @transform_4(%arg0: i32, %arg1: i32) -> (i32, i32) {
    %c0_i32 = arith.constant 0 : i32
    %c0_i32_0 = arith.constant 0 : i32
    %c0_i32_1 = arith.constant 0 : i32
    return %c0_i32, %c0_i32_0 : i32, i32
  }
  func.func @transform_5(%arg0: i32, %arg1: i32) -> (i32, i32, i32) {
    %0 = arith.muli %arg0, %arg1 : i32
    %c0_i32 = arith.constant 0 : i32
    %c0_i32_0 = arith.constant 0 : i32
    %c0_i32_1 = arith.constant 0 : i32
    return %0, %c0_i32, %c0_i32_0 : i32, i32, i32
  }
}

module attributes {stable_mosaic.version = 11 : i64} {
  func.func @_conv_bn_relu_kernel(%arg0: i32, %arg1: i32, %arg2: memref<1x32x256xbf16, #tpu.memory_space<vmem>>, %arg3: memref<1024x128xbf16, #tpu.memory_space<vmem>>, %arg4: memref<1x128xf32, #tpu.memory_space<vmem>>, %arg5: memref<1x128xf32, #tpu.memory_space<vmem>>, %arg6: memref<20x1xf32, #tpu.memory_space<vmem>>, %arg7: memref<1x20x128xf32, #tpu.memory_space<vmem>>, %arg8: memref<1x128xf32, #tpu.memory_space<vmem>>, %arg9: memref<1x128xf32, #tpu.memory_space<vmem>>, %arg10: memref<1x128xf32, #tpu.memory_space<vmem>>, %arg11: memref<1x128xf32, #tpu.memory_space<vmem>>) attributes {dimension_semantics = [#tpu.dimension_semantics<arbitrary>, #tpu.dimension_semantics<arbitrary>], iteration_bounds = array<i64: 2, 2>, scalar_prefetch = 0 : i64, scratch_operands = 4 : i64, tpu.core_type = #tpu.core_type<tc>, window_params = [{transform_indices = @transform_0, window_bounds = array<i64: 1, 32, 256>}, {pipeline_mode = #tpu.pipeline_mode<synchronous>, transform_indices = @transform_1, window_bounds = array<i64: 1024, 128>}, {pipeline_mode = #tpu.pipeline_mode<synchronous>, transform_indices = @transform_2, window_bounds = array<i64: 1, 128>}, {pipeline_mode = #tpu.pipeline_mode<synchronous>, transform_indices = @transform_3, window_bounds = array<i64: 1, 128>}, {pipeline_mode = #tpu.pipeline_mode<synchronous>, transform_indices = @transform_4, window_bounds = array<i64: 20, 1>}, {transform_indices = @transform_5, window_bounds = array<i64: 1, 20, 128>}]} {
    %c0 = arith.constant 0 : index
    %c0_0 = arith.constant 0 : index
    %c0_1 = arith.constant 0 : index
    %0 = vector.load %arg2[%c0, %c0_0, %c0_1] : memref<1x32x256xbf16, #tpu.memory_space<vmem>>, vector<1x32x256xbf16>
    %1 = vector.shape_cast %0 : vector<1x32x256xbf16> to vector<32x256xbf16>
    %c0_2 = arith.constant 0 : index
    %c0_3 = arith.constant 0 : index
    %2 = vector.load %arg3[%c0_2, %c0_3] : memref<1024x128xbf16, #tpu.memory_space<vmem>>, vector<256x128xbf16>
    %cst = arith.constant dense<0.000000e+00> : vector<32x128xf32>
    %3 = tpu.matmul %1, %2, %cst {dimension_numbers = #tpu.dot_dimension_numbers<[1], [0], [0], [1], [0, 0, 1, 1], [], []>} : vector<32x256xbf16>, vector<256x128xbf16>, vector<32x128xf32> -> vector<32x128xf32>
    %4 = vector.extract_strided_slice %3 {offsets = [0, 0], sizes = [20, 128], strides = [1, 1]} : vector<32x128xf32> to vector<20x128xf32>
    %c256 = arith.constant 256 : index
    %c0_4 = arith.constant 0 : index
    %5 = vector.load %arg3[%c256, %c0_4] : memref<1024x128xbf16, #tpu.memory_space<vmem>>, vector<256x128xbf16>
    %cst_5 = arith.constant dense<0.000000e+00> : vector<32x128xf32>
    %6 = tpu.matmul %1, %5, %cst_5 {dimension_numbers = #tpu.dot_dimension_numbers<[1], [0], [0], [1], [0, 0, 1, 1], [], []>} : vector<32x256xbf16>, vector<256x128xbf16>, vector<32x128xf32> -> vector<32x128xf32>
    %7 = vector.extract_strided_slice %6 {offsets = [1, 0], sizes = [20, 128], strides = [1, 1]} : vector<32x128xf32> to vector<20x128xf32>
    %8 = arith.addf %4, %7 : vector<20x128xf32>
    %c512 = arith.constant 512 : index
    %c0_6 = arith.constant 0 : index
    %9 = vector.load %arg3[%c512, %c0_6] : memref<1024x128xbf16, #tpu.memory_space<vmem>>, vector<256x128xbf16>
    %cst_7 = arith.constant dense<0.000000e+00> : vector<32x128xf32>
    %10 = tpu.matmul %1, %9, %cst_7 {dimension_numbers = #tpu.dot_dimension_numbers<[1], [0], [0], [1], [0, 0, 1, 1], [], []>} : vector<32x256xbf16>, vector<256x128xbf16>, vector<32x128xf32> -> vector<32x128xf32>
    %11 = vector.extract_strided_slice %10 {offsets = [5, 0], sizes = [20, 128], strides = [1, 1]} : vector<32x128xf32> to vector<20x128xf32>
    %12 = arith.addf %8, %11 : vector<20x128xf32>
    %c768 = arith.constant 768 : index
    %c0_8 = arith.constant 0 : index
    %13 = vector.load %arg3[%c768, %c0_8] : memref<1024x128xbf16, #tpu.memory_space<vmem>>, vector<256x128xbf16>
    %cst_9 = arith.constant dense<0.000000e+00> : vector<32x128xf32>
    %14 = tpu.matmul %1, %13, %cst_9 {dimension_numbers = #tpu.dot_dimension_numbers<[1], [0], [0], [1], [0, 0, 1, 1], [], []>} : vector<32x256xbf16>, vector<256x128xbf16>, vector<32x128xf32> -> vector<32x128xf32>
    %15 = vector.extract_strided_slice %14 {offsets = [6, 0], sizes = [20, 128], strides = [1, 1]} : vector<32x128xf32> to vector<20x128xf32>
    %16 = arith.addf %12, %15 : vector<20x128xf32>
    %c0_i32 = arith.constant 0 : i32
    %17 = arith.cmpi eq, %arg0, %c0_i32 : i32
    %18 = arith.extui %17 : i1 to i32
    %c0_i32_10 = arith.constant 0 : i32
    %19 = arith.cmpi ne, %18, %c0_i32_10 : i32
    scf.if %19 {
      %c0_i32_12 = arith.constant 0 : i32
      %23 = arith.cmpi eq, %arg1, %c0_i32_12 : i32
      %24 = arith.extui %23 : i1 to i32
      %c0_i32_13 = arith.constant 0 : i32
      %25 = arith.cmpi ne, %24, %c0_i32_13 : i32
      scf.if %25 {
        %cst_28 = arith.constant 0.000000e+00 : f32
        %43 = vector.broadcast %cst_28 : f32 to vector<1x128xf32>
        %c0_29 = arith.constant 0 : index
        %c0_30 = arith.constant 0 : index
        %44 = vector.load %arg8[%c0_29, %c0_30] : memref<1x128xf32, #tpu.memory_space<vmem>>, vector<1x128xf32>
        tpu.vector_store %arg8[%c0_29, %c0_30], %43 {strides = array<i32>} : memref<1x128xf32, #tpu.memory_space<vmem>>, vector<1x128xf32>,
        %cst_31 = arith.constant 0.000000e+00 : f32
        %45 = vector.broadcast %cst_31 : f32 to vector<1x128xf32>
        %c0_32 = arith.constant 0 : index
        %c0_33 = arith.constant 0 : index
        %46 = vector.load %arg9[%c0_32, %c0_33] : memref<1x128xf32, #tpu.memory_space<vmem>>, vector<1x128xf32>
        tpu.vector_store %arg9[%c0_32, %c0_33], %45 {strides = array<i32>} : memref<1x128xf32, #tpu.memory_space<vmem>>, vector<1x128xf32>,
      } else {
      }
      %c0_14 = arith.constant 0 : index
      %c0_15 = arith.constant 0 : index
      %26 = vector.load %arg6[%c0_14, %c0_15] : memref<20x1xf32, #tpu.memory_space<vmem>>, vector<20x1xf32>
      %27 = vector.broadcast %26 : vector<20x1xf32> to vector<20x128xf32>
      %28 = arith.mulf %16, %27 : vector<20x128xf32>
      %c0_16 = arith.constant 0 : index
      %c0_17 = arith.constant 0 : index
      %29 = vector.load %arg8[%c0_16, %c0_17] : memref<1x128xf32, #tpu.memory_space<vmem>>, vector<1x128xf32>
      %cst_18 = arith.constant dense<0.000000e+00> : vector<128xf32>
      %30 = vector.multi_reduction <add>, %28, %cst_18 [0] : vector<20x128xf32> to vector<128xf32>
      %31 = vector.shape_cast %30 : vector<128xf32> to vector<1x128xf32>
      %32 = arith.addf %29, %31 : vector<1x128xf32>
      %c0_19 = arith.constant 0 : index
      %c0_20 = arith.constant 0 : index
      %33 = vector.load %arg8[%c0_19, %c0_20] : memref<1x128xf32, #tpu.memory_space<vmem>>, vector<1x128xf32>
      tpu.vector_store %arg8[%c0_19, %c0_20], %32 {strides = array<i32>} : memref<1x128xf32, #tpu.memory_space<vmem>>, vector<1x128xf32>,
      %c0_21 = arith.constant 0 : index
      %c0_22 = arith.constant 0 : index
      %34 = vector.load %arg9[%c0_21, %c0_22] : memref<1x128xf32, #tpu.memory_space<vmem>>, vector<1x128xf32>
      %35 = arith.mulf %28, %28 : vector<20x128xf32>
      %cst_23 = arith.constant dense<0.000000e+00> : vector<128xf32>
      %36 = vector.multi_reduction <add>, %35, %cst_23 [0] : vector<20x128xf32> to vector<128xf32>
      %37 = vector.shape_cast %36 : vector<128xf32> to vector<1x128xf32>
      %38 = arith.addf %34, %37 : vector<1x128xf32>
      %c0_24 = arith.constant 0 : index
      %c0_25 = arith.constant 0 : index
      %39 = vector.load %arg9[%c0_24, %c0_25] : memref<1x128xf32, #tpu.memory_space<vmem>>, vector<1x128xf32>
      tpu.vector_store %arg9[%c0_24, %c0_25], %38 {strides = array<i32>} : memref<1x128xf32, #tpu.memory_space<vmem>>, vector<1x128xf32>,
      %c1_i32_26 = arith.constant 1 : i32
      %40 = arith.cmpi eq, %arg1, %c1_i32_26 : i32
      %41 = arith.extui %40 : i1 to i32
      %c0_i32_27 = arith.constant 0 : i32
      %42 = arith.cmpi ne, %41, %c0_i32_27 : i32
      scf.if %42 {
        %c0_28 = arith.constant 0 : index
        %c0_29 = arith.constant 0 : index
        %43 = vector.load %arg8[%c0_28, %c0_29] : memref<1x128xf32, #tpu.memory_space<vmem>>, vector<1x128xf32>
        %cst_30 = arith.constant 3.125000e-02 : f32
        %44 = vector.broadcast %cst_30 : f32 to vector<1x128xf32>
        %45 = arith.mulf %43, %44 : vector<1x128xf32>
        %c0_31 = arith.constant 0 : index
        %c0_32 = arith.constant 0 : index
        %46 = vector.load %arg9[%c0_31, %c0_32] : memref<1x128xf32, #tpu.memory_space<vmem>>, vector<1x128xf32>
        %cst_33 = arith.constant 3.125000e-02 : f32
        %47 = vector.broadcast %cst_33 : f32 to vector<1x128xf32>
        %48 = arith.mulf %46, %47 : vector<1x128xf32>
        %49 = arith.mulf %45, %45 : vector<1x128xf32>
        %50 = arith.subf %48, %49 : vector<1x128xf32>
        %cst_34 = arith.constant 0.000000e+00 : f32
        %51 = vector.broadcast %cst_34 : f32 to vector<1x128xf32>
        %52 = arith.maximumf %50, %51 : vector<1x128xf32>
        %c0_35 = arith.constant 0 : index
        %c0_36 = arith.constant 0 : index
        %53 = vector.load %arg4[%c0_35, %c0_36] : memref<1x128xf32, #tpu.memory_space<vmem>>, vector<1x128xf32>
        %cst_37 = arith.constant 9.99999974E-6 : f32
        %54 = vector.broadcast %cst_37 : f32 to vector<1x128xf32>
        %55 = arith.addf %52, %54 : vector<1x128xf32>
        %56 = math.rsqrt %55 : vector<1x128xf32>
        %57 = arith.mulf %53, %56 : vector<1x128xf32>
        %c0_38 = arith.constant 0 : index
        %c0_39 = arith.constant 0 : index
        %58 = vector.load %arg10[%c0_38, %c0_39] : memref<1x128xf32, #tpu.memory_space<vmem>>, vector<1x128xf32>
        tpu.vector_store %arg10[%c0_38, %c0_39], %57 {strides = array<i32>} : memref<1x128xf32, #tpu.memory_space<vmem>>, vector<1x128xf32>,
        %c0_40 = arith.constant 0 : index
        %c0_41 = arith.constant 0 : index
        %59 = vector.load %arg5[%c0_40, %c0_41] : memref<1x128xf32, #tpu.memory_space<vmem>>, vector<1x128xf32>
        %60 = arith.mulf %45, %57 : vector<1x128xf32>
        %61 = arith.subf %59, %60 : vector<1x128xf32>
        %c0_42 = arith.constant 0 : index
        %c0_43 = arith.constant 0 : index
        %62 = vector.load %arg11[%c0_42, %c0_43] : memref<1x128xf32, #tpu.memory_space<vmem>>, vector<1x128xf32>
        tpu.vector_store %arg11[%c0_42, %c0_43], %61 {strides = array<i32>} : memref<1x128xf32, #tpu.memory_space<vmem>>, vector<1x128xf32>,
      } else {
      }
    } else {
    }
    %c1_i32 = arith.constant 1 : i32
    %20 = arith.cmpi eq, %arg0, %c1_i32 : i32
    %21 = arith.extui %20 : i1 to i32
    %c0_i32_11 = arith.constant 0 : i32
    %22 = arith.cmpi ne, %21, %c0_i32_11 : i32
    scf.if %22 {
      %c0_12 = arith.constant 0 : index
      %c0_13 = arith.constant 0 : index
      %23 = vector.load %arg10[%c0_12, %c0_13] : memref<1x128xf32, #tpu.memory_space<vmem>>, vector<1x128xf32>
      %24 = vector.broadcast %23 : vector<1x128xf32> to vector<20x128xf32>
      %25 = arith.mulf %16, %24 : vector<20x128xf32>
      %c0_14 = arith.constant 0 : index
      %c0_15 = arith.constant 0 : index
      %26 = vector.load %arg11[%c0_14, %c0_15] : memref<1x128xf32, #tpu.memory_space<vmem>>, vector<1x128xf32>
      %27 = vector.broadcast %26 : vector<1x128xf32> to vector<20x128xf32>
      %28 = arith.addf %25, %27 : vector<20x128xf32>
      %cst_16 = arith.constant 0.000000e+00 : f32
      %29 = vector.broadcast %cst_16 : f32 to vector<20x128xf32>
      %30 = arith.maximumf %28, %29 : vector<20x128xf32>
      %c0_17 = arith.constant 0 : index
      %c0_18 = arith.constant 0 : index
      %c0_19 = arith.constant 0 : index
      %31 = vector.load %arg7[%c0_17, %c0_18, %c0_19] : memref<1x20x128xf32, #tpu.memory_space<vmem>>, vector<1x20x128xf32>
      %32 = vector.shape_cast %31 : vector<1x20x128xf32> to vector<20x128xf32>
      %33 = vector.shape_cast %30 : vector<20x128xf32> to vector<1x20x128xf32>
      tpu.vector_store %arg7[%c0_17, %c0_18, %c0_19], %33 {strides = array<i32>} : memref<1x20x128xf32, #tpu.memory_space<vmem>>, vector<1x20x128xf32>,
    } else {
    }
    return
  }
  func.func @transform_0(%arg0: i32, %arg1: i32) -> (i32, i32, i32) {
    %c0_i32 = arith.constant 0 : i32
    %c0_i32_0 = arith.constant 0 : i32
    %c0_i32_1 = arith.constant 0 : i32
    return %arg1, %c0_i32, %c0_i32_0 : i32, i32, i32
  }
  func.func @transform_1(%arg0: i32, %arg1: i32) -> (i32, i32) {
    %c0_i32 = arith.constant 0 : i32
    %c0_i32_0 = arith.constant 0 : i32
    %c0_i32_1 = arith.constant 0 : i32
    return %c0_i32, %c0_i32_0 : i32, i32
  }
  func.func @transform_2(%arg0: i32, %arg1: i32) -> (i32, i32) {
    %c0_i32 = arith.constant 0 : i32
    %c0_i32_0 = arith.constant 0 : i32
    %c0_i32_1 = arith.constant 0 : i32
    return %c0_i32, %c0_i32_0 : i32, i32
  }
  func.func @transform_3(%arg0: i32, %arg1: i32) -> (i32, i32) {
    %c0_i32 = arith.constant 0 : i32
    %c0_i32_0 = arith.constant 0 : i32
    %c0_i32_1 = arith.constant 0 : i32
    return %c0_i32, %c0_i32_0 : i32, i32
  }
  func.func @transform_4(%arg0: i32, %arg1: i32) -> (i32, i32) {
    %c0_i32 = arith.constant 0 : i32
    %c0_i32_0 = arith.constant 0 : i32
    %c0_i32_1 = arith.constant 0 : i32
    return %c0_i32, %c0_i32_0 : i32, i32
  }
  func.func @transform_5(%arg0: i32, %arg1: i32) -> (i32, i32, i32) {
    %0 = arith.muli %arg0, %arg1 : i32
    %c0_i32 = arith.constant 0 : i32
    %c0_i32_0 = arith.constant 0 : i32
    %c0_i32_1 = arith.constant 0 : i32
    return %0, %c0_i32, %c0_i32_0 : i32, i32, i32
  }
}

</mosaic_0001>

<llo_original>
// kernel: patcher_forward.2
$region0: #{patcher_forward.2}
  #allocation0 [shape = 'u32[]', space=smem, size = 0x4, offset = 0x4, fixed_abs, tag = 'smem constant byte address 0x4 - core index']
  #allocation1 [shape = 'u32[144,128]{1,0:T(1,128)}', space=vmem, size = 0x12000, scoped, tag = 'internal scratch']
  #allocation2 [shape = 'f32[1,64]{1,0:T(1,128)}', space=vmem, size = 0x200, scoped, tag = 'scratch operand']
  #allocation3 [shape = 'f32[1,64]{1,0:T(1,128)}', space=vmem, size = 0x200, scoped, tag = 'scratch operand']
  #allocation4 [shape = 'f32[1,64]{1,0:T(1,128)}', space=vmem, size = 0x200, scoped, tag = 'scratch operand']
  #allocation5 [shape = 'f32[1,64]{1,0:T(1,128)}', space=vmem, size = 0x200, scoped, tag = 'scratch operand']
  %s0 = inlined_call_operand.vmem [shape: bf16[2,96,16], index: 0, kind: input, shape index: {}]
  %s1 = inlined_call_operand.vmem [shape: bf16[64,64], index: 1, kind: input, shape index: {}]
  %s2 = inlined_call_operand.vmem [shape: f32[1,64], index: 2, kind: input, shape index: {}]
  %s3 = inlined_call_operand.vmem [shape: f32[1,64], index: 3, kind: input, shape index: {}]
  %s4 = inlined_call_operand.vmem [shape: f32[72,1], index: 4, kind: input, shape index: {}]
  %s5 = inlined_call_operand.vmem [shape: bf16[2,72,64], index: 5, kind: output, shape index: {}]
  %s6 = sld [smem:[#allocation0]]
  $region69: #{patcher_forward.2} parent=0
    _
  %s8 = ssub.s32 1, %s6
  %s9 = scalar_select 0, %s8, %s6
  loop: start=0, step=1, limit=6
  $region2: #{patcher_forward.2} parent=0 // loop_pre_header
    _
  $region3: #{patcher_forward.2} parent=0 // loop_header
    %s11 = sphi 0, %s15
    %p12 = scmp.ge.s32.totalorder %s11, 6
    %s18 = sphi 0, %s30
    %s19 = sphi 0, %s26
    %s20 = sphi 0, %s18
    %s21 = sphi 0, %s19
    %s22 = sphi 0, %s20
    %s23 = sphi 0, %s21
    %s33 = sphi 0, %s35
    %s36 = sphi 0, %s33
    %s37 = sphi 0, %s36
    %s53 = sphi 0, %s37
    %s57 = sphi 0, %s57
    %s59 = sphi 0, %s57
    %s60 = sphi 0, %s59
    %s74 = sphi 0, %s60
    %s78 = sphi 0, %s78
    %s80 = sphi 0, %s78
    %s81 = sphi 0, %s80
    %s95 = sphi 0, %s81
    %s99 = sphi 0, %s99
    %s101 = sphi 0, %s99
    %s102 = sphi 0, %s101
    %s116 = sphi 0, %s102
    %s120 = sphi 0, %s120
    %s122 = sphi 0, %s120
    %s123 = sphi 0, %s122
    %s137 = sphi 0, %s123
    %s145 = sphi 0, %s147
    %s148 = sphi 0, %s145
    %s149 = sphi 0, %s148
    %s165 = sphi 0, %s149
  $region4: #{patcher_forward.2} parent=0 // loop_header_branch
    %14 = sbr.rel (%p12) target = $region8
  $region5: #{patcher_forward.2} parent=0 // loop_body
    %s16 = ssub.s32 %s11, 1
    %s17 = ssub.s32 %s11, 2
    %s24 = sadd.s32 1, %s19
    %p25 = scmp.ge.s32.totalorder %s24, 2
    %s26 = scalar_select %p25, 0, %s24
    %s27 = sadd.s32 1, %s18
    %s28 = scalar_select %p25, %s27, %s18
    %p29 = scmp.ge.s32.totalorder %s28, 2
    %s30 = scalar_select %p29, 0, %s28
    %s31 = ssub.s32 %s19, %s26
    %p32 = scmp.eq.s32.totalorder %s31, 0
    %s34 = sadd.s32 %s33, 1
    %s35 = scalar_select %p32, %s33, %s34
    %p38 = pneg %p32
    %p39 = scmp.eq.s32.totalorder %s11, 3
    %p40 = por %p38, %p39
    %p41 = scmp.ne.s32.totalorder %s33, %s36
    %p42 = scmp.eq.s32.totalorder %s11, 0
    %p43 = por %p41, %p42
    %p44 = scmp.ne.s32.totalorder %s33, %s36
    %p45 = scmp.eq.s32.totalorder %s16, 3
    %p46 = por %p44, %p45
    %p47 = scmp.ne.s32.totalorder %s36, %s37
    %p48 = scmp.eq.s32.totalorder %s16, 0
    %p49 = por %p47, %p48
    %p50 = scmp.ne.s32.totalorder %s36, %s37
    %p51 = scmp.eq.s32.totalorder %s17, 3
    %p52 = por %p50, %p51
    %p54 = scmp.ne.s32.totalorder %s37, %s53
    %p55 = scmp.eq.s32.totalorder %s17, 0
    %p56 = por %p54, %p55
    %s58 = sadd.s32 %s57, 1
    %p61 = scmp.eq.s32.totalorder %s11, 3
    %p62 = scmp.ne.s32.totalorder %s57, %s59
    %p63 = scmp.eq.s32.totalorder %s11, 0
    %p64 = por %p62, %p63
    %p65 = scmp.ne.s32.totalorder %s57, %s59
    %p66 = scmp.eq.s32.totalorder %s16, 3
    %p67 = por %p65, %p66
    %p68 = scmp.ne.s32.totalorder %s59, %s60
    %p69 = scmp.eq.s32.totalorder %s16, 0
    %p70 = por %p68, %p69
    %p71 = scmp.ne.s32.totalorder %s59, %s60
    %p72 = scmp.eq.s32.totalorder %s17, 3
    %p73 = por %p71, %p72
    %p75 = scmp.ne.s32.totalorder %s60, %s74
    %p76 = scmp.eq.s32.totalorder %s17, 0
    %p77 = por %p75, %p76
    %s79 = sadd.s32 %s78, 1
    %p82 = scmp.eq.s32.totalorder %s11, 3
    %p83 = scmp.ne.s32.totalorder %s78, %s80
    %p84 = scmp.eq.s32.totalorder %s11, 0
    %p85 = por %p83, %p84
    %p86 = scmp.ne.s32.totalorder %s78, %s80
    %p87 = scmp.eq.s32.totalorder %s16, 3
    %p88 = por %p86, %p87
    %p89 = scmp.ne.s32.totalorder %s80, %s81
    %p90 = scmp.eq.s32.totalorder %s16, 0
    %p91 = por %p89, %p90
    %p92 = scmp.ne.s32.totalorder %s80, %s81
    %p93 = scmp.eq.s32.totalorder %s17, 3
    %p94 = por %p92, %p93
    %p96 = scmp.ne.s32.totalorder %s81, %s95
    %p97 = scmp.eq.s32.totalorder %s17, 0
    %p98 = por %p96, %p97
    %s100 = sadd.s32 %s99, 1
    %p103 = scmp.eq.s32.totalorder %s11, 3
    %p104 = scmp.ne.s32.totalorder %s99, %s101
    %p105 = scmp.eq.s32.totalorder %s11, 0
    %p106 = por %p104, %p105
    %p107 = scmp.ne.s32.totalorder %s99, %s101
    %p108 = scmp.eq.s32.totalorder %s16, 3
    %p109 = por %p107, %p108
    %p110 = scmp.ne.s32.totalorder %s101, %s102
    %p111 = scmp.eq.s32.totalorder %s16, 0
    %p112 = por %p110, %p111
    %p113 = scmp.ne.s32.totalorder %s101, %s102
    %p114 = scmp.eq.s32.totalorder %s17, 3
    %p115 = por %p113, %p114
    %p117 = scmp.ne.s32.totalorder %s102, %s116
    %p118 = scmp.eq.s32.totalorder %s17, 0
    %p119 = por %p117, %p118
    %s121 = sadd.s32 %s120, 1
    %p124 = scmp.eq.s32.totalorder %s11, 3
    %p125 = scmp.ne.s32.totalorder %s120, %s122
    %p126 = scmp.eq.s32.totalorder %s11, 0
    %p127 = por %p125, %p126
    %p128 = scmp.ne.s32.totalorder %s120, %s122
    %p129 = scmp.eq.s32.totalorder %s16, 3
    %p130 = por %p128, %p129
    %p131 = scmp.ne.s32.totalorder %s122, %s123
    %p132 = scmp.eq.s32.totalorder %s16, 0
    %p133 = por %p131, %p132
    %p134 = scmp.ne.s32.totalorder %s122, %s123
    %p135 = scmp.eq.s32.totalorder %s17, 3
    %p136 = por %p134, %p135
    %p138 = scmp.ne.s32.totalorder %s123, %s137
    %p139 = scmp.eq.s32.totalorder %s17, 0
    %p140 = por %p138, %p139
    %s141 = smul.u32 %s18, %s19
    %s142 = smul.u32 %s30, %s26
    %s143 = ssub.s32 %s141, %s142
    %p144 = scmp.eq.s32.totalorder %s143, 0
    %s146 = sadd.s32 %s145, 1
    %s147 = scalar_select %p144, %s145, %s146
    %p150 = pneg %p144
    %p151 = scmp.eq.s32.totalorder %s11, 3
    %p152 = por %p150, %p151
    %p153 = scmp.ne.s32.totalorder %s145, %s148
    %p154 = scmp.eq.s32.totalorder %s11, 0
    %p155 = por %p153, %p154
    %p156 = scmp.ne.s32.totalorder %s145, %s148
    %p157 = scmp.eq.s32.totalorder %s16, 3
    %p158 = por %p156, %p157
    %p159 = scmp.ne.s32.totalorder %s148, %s149
    %p160 = scmp.eq.s32.totalorder %s16, 0
    %p161 = por %p159, %p160
    %p162 = scmp.ne.s32.totalorder %s148, %s149
    %p163 = scmp.eq.s32.totalorder %s17, 3
    %p164 = por %p162, %p163
    %p166 = scmp.ne.s32.totalorder %s149, %s165
    %p167 = scmp.eq.s32.totalorder %s17, 0
    %p168 = por %p166, %p167
    %p169 = scmp.le.s32.totalorder 1, %s11
    %p170 = scmp.lt.s32.totalorder %s11, 5
    %p171 = pnand %p169, %p170
    %p172 = pneg %p171
    // Predicated region
    $region9: #{patcher_forward.2} parent=5 // pred_check
      _
    $region10: #{patcher_forward.2} parent=5 // pred_check_branch
      %174 = sbr.rel (%p171) target = $region12
    $region11: #{patcher_forward.2} parent=5 // pred_region
      %s175 = ssub.s32 %s11, 1
      // Predicated region
      $region13: #{patcher_forward.2} parent=11 // pred_check
        %p176 = pneg %p70
      $region14: #{patcher_forward.2} parent=11 // pred_check_branch
        %178 = sbr.rel (%p176) target = $region16
      $region15: #{patcher_forward.2} parent=11 // pred_region
        _
      $region16: #{patcher_forward.2} parent=11 // pred_fallthru
        _
      // Predicated region
      $region17: #{patcher_forward.2} parent=11 // pred_check
        %p179 = pneg %p91
      $region18: #{patcher_forward.2} parent=11 // pred_check_branch
        %181 = sbr.rel (%p179) target = $region20
      $region19: #{patcher_forward.2} parent=11 // pred_region
        _
      $region20: #{patcher_forward.2} parent=11 // pred_fallthru
        _
      // Predicated region
      $region21: #{patcher_forward.2} parent=11 // pred_check
        %p182 = pneg %p112
      $region22: #{patcher_forward.2} parent=11 // pred_check_branch
        %184 = sbr.rel (%p182) target = $region24
      $region23: #{patcher_forward.2} parent=11 // pred_region
        _
      $region24: #{patcher_forward.2} parent=11 // pred_fallthru
        _
      // Predicated region
      $region25: #{patcher_forward.2} parent=11 // pred_check
        %p185 = pneg %p133
      $region26: #{patcher_forward.2} parent=11 // pred_check_branch
        %187 = sbr.rel (%p185) target = $region28
      $region27: #{patcher_forward.2} parent=11 // pred_region
        _
      $region28: #{patcher_forward.2} parent=11 // pred_fallthru
        _
    $region12: #{patcher_forward.2} parent=5 // pred_fallthru
      _
    %p188 = scmp.lt.s32.totalorder %s11, 4
    // Predicated region
    $region29: #{patcher_forward.2} parent=5 // pred_check
      %p189 = pneg %p188
    $region30: #{patcher_forward.2} parent=5 // pred_check_branch
      %191 = sbr.rel (%p189) target = $region32
    $region31: #{patcher_forward.2} parent=5 // pred_region
      // Predicated region
      $region33: #{patcher_forward.2} parent=31 // pred_check
        %p192 = pneg %p43
      $region34: #{patcher_forward.2} parent=31 // pred_check_branch
        %194 = sbr.rel (%p192) target = $region36
      $region35: #{patcher_forward.2} parent=31 // pred_region
        %p195 = scmp.lt.s32.totalorder %s19, 1
        %s196 = scalar_select %p195, %s19, 1
        %s197 = smul.addr %s196, 12
        %s198 = smul.addr %s197, 4
        %s199 = scalar_lea.vmem %s0, %s198
      $region36: #{patcher_forward.2} parent=31 // pred_fallthru
        _
    $region32: #{patcher_forward.2} parent=5 // pred_fallthru
      _
    %p200 = scmp.le.s32.totalorder 1, %s11
    %p201 = scmp.lt.s32.totalorder %s11, 5
    %p202 = pnand %p200, %p201
    %p203 = pneg %p202
    // Predicated region
    $region37: #{patcher_forward.2} parent=5 // pred_check
      _
    $region38: #{patcher_forward.2} parent=5 // pred_check_branch
      %205 = sbr.rel (%p202) target = $region40
    $region39: #{patcher_forward.2} parent=5 // pred_region
      %s206 = ssub.s32 %s11, 1
      %p207 = scmp.lt.s32.totalorder %s21, 1
      %s208 = scalar_select %p207, %s21, 1
      %s209 = smul.addr %s208, 12
      %s210 = smul.addr %s209, 4
      %s211 = scalar_lea.vmem %s0, %s210
      %p212 = pneg %p49
      %p213 = pneg %p46
      %p214 = pneg %p70
      %p215 = pneg %p67
      %p216 = pneg %p91
      %p217 = pneg %p88
      %p218 = pneg %p112
      %p219 = pneg %p109
      %p220 = pneg %p133
      %p221 = pneg %p130
      %p222 = pneg %p161
      %p223 = pneg %p158
      %s224 = smul.u32 %s20, %s21
      %p225 = scmp.lt.s32.totalorder %s224, 1
      %s226 = scalar_select %p225, %s224, 1
      %s227 = smul.addr %s226, 9
      %s228 = smul.addr %s227, 4
      %s229 = scalar_lea.vmem %s5, %s228
      %p230 = scmp.lt.s32.totalorder %s21, 1
      %s231 = scalar_select %p230, %s21, 1
      %s232 = smul.addr %s231, 12
      %s233 = smul.addr %s232, 4
      %s234 = scalar_lea.vmem %s0, %s233
      %s235 = smul.u32 %s20, %s21
      %p236 = scmp.lt.s32.totalorder %s235, 1
      %s237 = scalar_select %p236, %s235, 1
      %s238 = smul.addr %s237, 9
      %s239 = smul.addr %s238, 4
      %s240 = scalar_lea.vmem %s5, %s239
      %s241 = smul.u32 %s20, %s21
      %v243 = vld [vmem:[%s234] sm:$0xf]
      %v244 = vld [vmem:[%s234 + $0x4] sm:$0xf]
      %v245 = vld [vmem:[%s234 + $0x8] sm:$0xf]
      %v246 = vld [vmem:[%s234 + $0xc] sm:$0xf]
      %v247 = vld [vmem:[%s234 + $0x10] sm:$0xf]
      %v248 = vld [vmem:[%s234 + $0x14] sm:$0xf]
      %v249 = vld [vmem:[%s234 + $0x18] sm:$0xf]
      %v250 = vld [vmem:[%s234 + $0x1c] sm:$0xf]
      %v251 = vld [vmem:[%s234 + $0x20] sm:$0xf]
      %v252 = vld [vmem:[%s234 + $0x24] sm:$0xf]
      %v253 = vld [vmem:[%s234 + $0x28] sm:$0xf]
      %v254 = vld [vmem:[%s234 + $0x2c] sm:$0xf]
      %v255 = vld [vmem:[%s1] sm:$0xf]
      %v256 = vld [vmem:[%s1 + $0x4] sm:$0xf]
      %v269 = vunpack.c.l.b16 %v243
      %v270 = vunpack.c.l.b16 %v244
      %v271 = vunpack.c.l.b16 %v245
      %v272 = vunpack.c.l.b16 %v246
      %v273 = vunpack.c.l.b16 %v247
      %v274 = vunpack.c.l.b16 %v248
      %v275 = vunpack.c.l.b16 %v249
      %v276 = vunpack.c.l.b16 %v250
      %v277 = vunpack.c.l.b16 %v251
      %v278 = vunpack.c.l.b16 %v252
      %v279 = vunpack.c.l.b16 %v253
      %v280 = vunpack.c.l.b16 %v254
      %v281 = vpack.c.b16 %v270, %v269
      %v282 = vpack.c.b16 %v272, %v271
      %v283 = vpack.c.b16 %v274, %v273
      %v284 = vpack.c.b16 %v276, %v275
      %v285 = vpack.c.b16 %v278, %v277
      %v286 = vpack.c.b16 %v280, %v279
      %v289 = vunpack.c.l.b16 %v255
      %v290 = vunpack.c.l.b16 %v256
      %v291 = vpack.c.b16 %v290, %v289
      %vm293 = vcmask 130048
      %v295 = vsel %vm293, %v281, 0
      %v298 = vsel %vm293, %v282, 0
      %v301 = vsel %vm293, %v283, 0
      %v304 = vsel %vm293, %v284, 0
      %v307 = vsel %vm293, %v285, 0
      %v310 = vsel %vm293, %v286, 0
      %312 = vmatprep.subr.bf16.mxu0 0
      %313 = vmatpush1.bf16.msra.mxu0 %v291
      %314 = vmatprep.subr.bf16.mxu0 0
      %315 = vmatpush1.bf16.msra.mxu0 0
      %316 = vmatprep.subr.bf16.mxu0 0
      %317 = vmatpush1.bf16.msra.mxu0 0
      %318 = vmatprep.subr.bf16.mxu0 0
      %319 = vmatpush1.bf16.msra.mxu0 0
      %320 = vmatprep.subr.bf16.mxu0 0
      %321 = vmatpush1.bf16.msra.mxu0 0
      %322 = vmatprep.subr.bf16.mxu0 0
      %323 = vmatpush1.bf16.msra.mxu0 0
      %324 = vmatprep.subr.bf16.mxu0 0
      %325 = vmatpush1.bf16.msra.mxu0 0
      %326 = vmatprep.subr.bf16.mxu0 0
      %327 = vmatpush1.bf16.msra.mxu0 0
      %328 = vmatprep.subr.bf16.mxu0 0
      %329 = vmatpush1.bf16.msra.mxu0 0
      %330 = vmatprep.subr.bf16.mxu0 0
      %331 = vmatpush1.bf16.msra.mxu0 0
      %332 = vmatprep.subr.bf16.mxu0 0
      %333 = vmatpush1.bf16.msra.mxu0 0
      %334 = vmatprep.subr.bf16.mxu0 0
      %335 = vmatpush1.bf16.msra.mxu0 0
      %336 = vmatprep.subr.bf16.mxu0 0
      %337 = vmatpush1.bf16.msra.mxu0 0
      %338 = vmatprep.subr.bf16.mxu0 0
      %339 = vmatpush1.bf16.msra.mxu0 0
      %340 = vmatprep.subr.bf16.mxu0 0
      %341 = vmatpush1.bf16.msra.mxu0 0
      %342 = vmatprep.subr.bf16.mxu0 0
      %343 = vmatpush1.bf16.msra.mxu0 0
      %344 = vmatprep.mubr.bf16.mxu0 0
      %345 = vmatmul.mubr.bf16.gmra.mrb[0].mxu0 %v295
      %v346 = vpop.f32.mrb[0].mxu0
      %v347 = vadd.f32 0.0, %v346
      %v348 = vpop.f32.mrb[0].mxu0
      %v349 = vpop.f32.mrb[0].mxu0
      %v350 = vadd.f32 0.0, %v349
      %v351 = vpop.f32.mrb[0].mxu0
      %352 = vmatprep.mubr.bf16.mxu0 0
      %353 = vmatmul.mubr.bf16.gmra.mrb[0].mxu0 %v298
      %v354 = vpop.f32.mrb[0].mxu0
      %v355 = vadd.f32 0.0, %v354
      %v356 = vpop.f32.mrb[0].mxu0
      %v357 = vpop.f32.mrb[0].mxu0
      %v358 = vadd.f32 0.0, %v357
      %v359 = vpop.f32.mrb[0].mxu0
      %360 = vmatprep.mubr.bf16.mxu0 0
      %361 = vmatmul.mubr.bf16.gmra.mrb[0].mxu0 %v301
      %v362 = vpop.f32.mrb[0].mxu0
      %v363 = vadd.f32 0.0, %v362
      %v364 = vpop.f32.mrb[0].mxu0
      %v365 = vpop.f32.mrb[0].mxu0
      %v366 = vadd.f32 0.0, %v365
      %v367 = vpop.f32.mrb[0].mxu0
      %368 = vmatprep.mubr.bf16.mxu0 0
      %369 = vmatmul.mubr.bf16.gmra.mrb[0].mxu0 %v304
      %v370 = vpop.f32.mrb[0].mxu0
      %v371 = vadd.f32 0.0, %v370
      %v372 = vpop.f32.mrb[0].mxu0
      %v373 = vpop.f32.mrb[0].mxu0
      %v374 = vadd.f32 0.0, %v373
      %v375 = vpop.f32.mrb[0].mxu0
      %376 = vmatprep.mubr.bf16.mxu0 0
      %377 = vmatmul.mubr.bf16.gmra.mrb[0].mxu0 %v307
      %v378 = vpop.f32.mrb[0].mxu0
      %v379 = vadd.f32 0.0, %v378
      %v380 = vpop.f32.mrb[0].mxu0
      %v381 = vpop.f32.mrb[0].mxu0
      %v382 = vpop.f32.mrb[0].mxu0
      %383 = vmatprep.mubr.bf16.mxu0 0
      %384 = vmatmul.mubr.bf16.gmra.mrb[0].mxu0 %v310
      %v385 = vpop.f32.mrb[0].mxu0
      %v386 = vpop.f32.mrb[0].mxu0
      %v387 = vpop.f32.mrb[0].mxu0
      %v388 = vpop.f32.mrb[0].mxu0
      %389 = vdwg.mxu0
      %v390 = vld [vmem:[%s1 + $0x8] sm:$0xf]
      %v391 = vld [vmem:[%s1 + $0xc] sm:$0xf]
      %v394 = vunpack.c.l.b16 %v390
      %v395 = vunpack.c.l.b16 %v391
      %v396 = vpack.c.b16 %v395, %v394
      %398 = vmatprep.subr.bf16.mxu0 0
      %399 = vmatpush1.bf16.msra.mxu0 %v396
      %400 = vmatprep.subr.bf16.mxu0 0
      %401 = vmatpush1.bf16.msra.mxu0 0
      %402 = vmatprep.subr.bf16.mxu0 0
      %403 = vmatpush1.bf16.msra.mxu0 0
      %404 = vmatprep.subr.bf16.mxu0 0
      %405 = vmatpush1.bf16.msra.mxu0 0
      %406 = vmatprep.subr.bf16.mxu0 0
      %407 = vmatpush1.bf16.msra.mxu0 0
      %408 = vmatprep.subr.bf16.mxu0 0
      %409 = vmatpush1.bf16.msra.mxu0 0
      %410 = vmatprep.subr.bf16.mxu0 0
      %411 = vmatpush1.bf16.msra.mxu0 0
      %412 = vmatprep.subr.bf16.mxu0 0
      %413 = vmatpush1.bf16.msra.mxu0 0
      %414 = vmatprep.subr.bf16.mxu0 0
      %415 = vmatpush1.bf16.msra.mxu0 0
      %416 = vmatprep.subr.bf16.mxu0 0
      %417 = vmatpush1.bf16.msra.mxu0 0
      %418 = vmatprep.subr.bf16.mxu0 0
      %419 = vmatpush1.bf16.msra.mxu0 0
      %420 = vmatprep.subr.bf16.mxu0 0
      %421 = vmatpush1.bf16.msra.mxu0 0
      %422 = vmatprep.subr.bf16.mxu0 0
      %423 = vmatpush1.bf16.msra.mxu0 0
      %424 = vmatprep.subr.bf16.mxu0 0
      %425 = vmatpush1.bf16.msra.mxu0 0
      %426 = vmatprep.subr.bf16.mxu0 0
      %427 = vmatpush1.bf16.msra.mxu0 0
      %428 = vmatprep.subr.bf16.mxu0 0
      %429 = vmatpush1.bf16.msra.mxu0 0
      %430 = vmatprep.mubr.bf16.mxu0 0
      %431 = vmatmul.mubr.bf16.gmra.mrb[0].mxu0 %v295
      %v432 = vpop.f32.mrb[0].mxu0
      %v433 = vadd.f32 0.0, %v432
      %v434 = vpop.f32.mrb[0].mxu0
      %v435 = vpop.f32.mrb[0].mxu0
      %v436 = vadd.f32 0.0, %v435
      %v437 = vpop.f32.mrb[0].mxu0
      %438 = vmatprep.mubr.bf16.mxu0 0
      %439 = vmatmul.mubr.bf16.gmra.mrb[0].mxu0 %v298
      %v440 = vpop.f32.mrb[0].mxu0
      %v441 = vadd.f32 0.0, %v440
      %v442 = vpop.f32.mrb[0].mxu0
      %v443 = vpop.f32.mrb[0].mxu0
      %v444 = vadd.f32 0.0, %v443
      %v445 = vpop.f32.mrb[0].mxu0
      %446 = vmatprep.mubr.bf16.mxu0 0
      %447 = vmatmul.mubr.bf16.gmra.mrb[0].mxu0 %v301
      %v448 = vpop.f32.mrb[0].mxu0
      %v449 = vadd.f32 0.0, %v448
      %v450 = vpop.f32.mrb[0].mxu0
      %v451 = vpop.f32.mrb[0].mxu0
      %v452 = vadd.f32 0.0, %v451
      %v453 = vpop.f32.mrb[0].mxu0
      %454 = vmatprep.mubr.bf16.mxu0 0
      %455 = vmatmul.mubr.bf16.gmra.mrb[0].mxu0 %v304
      %v456 = vpop.f32.mrb[0].mxu0
      %v457 = vadd.f32 0.0, %v456
      %v458 = vpop.f32.mrb[0].mxu0
      %v459 = vpop.f32.mrb[0].mxu0
      %v460 = vadd.f32 0.0, %v459
      %v461 = vpop.f32.mrb[0].mxu0
      %462 = vmatprep.mubr.bf16.mxu0 0
      %463 = vmatmul.mubr.bf16.gmra.mrb[0].mxu0 %v307
      %v464 = vpop.f32.mrb[0].mxu0
      %v465 = vadd.f32 0.0, %v464
      %v466 = vpop.f32.mrb[0].mxu0
      %v467 = vpop.f32.mrb[0].mxu0
      %v468 = vadd.f32 0.0, %v467
      %v469 = vpop.f32.mrb[0].mxu0
      %470 = vmatprep.mubr.bf16.mxu0 0
      %471 = vmatmul.mubr.bf16.gmra.mrb[0].mxu0 %v310
      %v472 = vpop.f32.mrb[0].mxu0
      %v473 = vpop.f32.mrb[0].mxu0
      %v474 = vpop.f32.mrb[0].mxu0
      %v475 = vpop.f32.mrb[0].mxu0
      %476 = vdwg.mxu0
      %vm487 = vcmask 1046528
      %v488 = vrot.slane %v433, 1
      %v489 = vrot.slane %v436, 1
      %v490 = vsel %vm487, %v488, %v489
      %v491 = vrot.slane %v441, 1
      %v492 = vsel %vm487, %v489, %v491
      %v493 = vrot.slane %v444, 1
      %v494 = vsel %vm487, %v491, %v493
      %v495 = vrot.slane %v449, 1
      %v496 = vsel %vm487, %v493, %v495
      %v497 = vrot.slane %v452, 1
      %v498 = vsel %vm487, %v495, %v497
      %v499 = vrot.slane %v457, 1
      %v500 = vsel %vm487, %v497, %v499
      %v501 = vrot.slane %v460, 1
      %v502 = vsel %vm487, %v499, %v501
      %v503 = vrot.slane %v465, 1
      %v504 = vsel %vm487, %v501, %v503
      %v505 = vrot.slane %v468, 1
      %v506 = vsel %vm487, %v503, %v505
      %v516 = vadd.f32 %v347, %v490
      %v517 = vadd.f32 %v350, %v492
      %v518 = vadd.f32 %v355, %v494
      %v519 = vadd.f32 %v358, %v496
      %v520 = vadd.f32 %v363, %v498
      %v521 = vadd.f32 %v366, %v500
      %v522 = vadd.f32 %v371, %v502
      %v523 = vadd.f32 %v374, %v504
      %v524 = vadd.f32 %v379, %v506
      %v525 = vld [vmem:[%s1 + $0x10] sm:$0xf]
      %v526 = vld [vmem:[%s1 + $0x14] sm:$0xf]
      %v529 = vunpack.c.l.b16 %v525
      %v530 = vunpack.c.l.b16 %v526
      %v531 = vpack.c.b16 %v530, %v529
      %533 = vmatprep.subr.bf16.mxu0 0
      %534 = vmatpush1.bf16.msra.mxu0 %v531
      %535 = vmatprep.subr.bf16.mxu0 0
      %536 = vmatpush1.bf16.msra.mxu0 0
      %537 = vmatprep.subr.bf16.mxu0 0
      %538 = vmatpush1.bf16.msra.mxu0 0
      %539 = vmatprep.subr.bf16.mxu0 0
      %540 = vmatpush1.bf16.msra.mxu0 0
      %541 = vmatprep.subr.bf16.mxu0 0
      %542 = vmatpush1.bf16.msra.mxu0 0
      %543 = vmatprep.subr.bf16.mxu0 0
      %544 = vmatpush1.bf16.msra.mxu0 0
      %545 = vmatprep.subr.bf16.mxu0 0
      %546 = vmatpush1.bf16.msra.mxu0 0
      %547 = vmatprep.subr.bf16.mxu0 0
      %548 = vmatpush1.bf16.msra.mxu0 0
      %549 = vmatprep.subr.bf16.mxu0 0
      %550 = vmatpush1.bf16.msra.mxu0 0
      %551 = vmatprep.subr.bf16.mxu0 0
      %552 = vmatpush1.bf16.msra.mxu0 0
      %553 = vmatprep.subr.bf16.mxu0 0
      %554 = vmatpush1.bf16.msra.mxu0 0
      %555 = vmatprep.subr.bf16.mxu0 0
      %556 = vmatpush1.bf16.msra.mxu0 0
      %557 = vmatprep.subr.bf16.mxu0 0
      %558 = vmatpush1.bf16.msra.mxu0 0
      %559 = vmatprep.subr.bf16.mxu0 0
      %560 = vmatpush1.bf16.msra.mxu0 0
      %561 = vmatprep.subr.bf16.mxu0 0
      %562 = vmatpush1.bf16.msra.mxu0 0
      %563 = vmatprep.subr.bf16.mxu0 0
      %564 = vmatpush1.bf16.msra.mxu0 0
      %565 = vmatprep.mubr.bf16.mxu0 0
      %566 = vmatmul.mubr.bf16.gmra.mrb[0].mxu0 %v295
      %v567 = vpop.f32.mrb[0].mxu0
      %v568 = vpop.f32.mrb[0].mxu0
      %v569 = vpop.f32.mrb[0].mxu0
      %v570 = vadd.f32 0.0, %v569
      %v571 = vpop.f32.mrb[0].mxu0
      %572 = vmatprep.mubr.bf16.mxu0 0
      %573 = vmatmul.mubr.bf16.gmra.mrb[0].mxu0 %v298
      %v574 = vpop.f32.mrb[0].mxu0
      %v575 = vadd.f32 0.0, %v574
      %v576 = vpop.f32.mrb[0].mxu0
      %v577 = vpop.f32.mrb[0].mxu0
      %v578 = vadd.f32 0.0, %v577
      %v579 = vpop.f32.mrb[0].mxu0
      %580 = vmatprep.mubr.bf16.mxu0 0
      %581 = vmatmul.mubr.bf16.gmra.mrb[0].mxu0 %v301
      %v582 = vpop.f32.mrb[0].mxu0
      %v583 = vadd.f32 0.0, %v582
      %v584 = vpop.f32.mrb[0].mxu0
      %v585 = vpop.f32.mrb[0].mxu0
      %v586 = vadd.f32 0.0, %v585
      %v587 = vpop.f32.mrb[0].mxu0
      %588 = vmatprep.mubr.bf16.mxu0 0
      %589 = vmatmul.mubr.bf16.gmra.mrb[0].mxu0 %v304
      %v590 = vpop.f32.mrb[0].mxu0
      %v591 = vadd.f32 0.0, %v590
      %v592 = vpop.f32.mrb[0].mxu0
      %v593 = vpop.f32.mrb[0].mxu0
      %v594 = vadd.f32 0.0, %v593
      %v595 = vpop.f32.mrb[0].mxu0
      %596 = vmatprep.mubr.bf16.mxu0 0
      %597 = vmatmul.mubr.bf16.gmra.mrb[0].mxu0 %v307
      %v598 = vpop.f32.mrb[0].mxu0
      %v599 = vadd.f32 0.0, %v598
      %v600 = vpop.f32.mrb[0].mxu0
      %v601 = vpop.f32.mrb[0].mxu0
      %v602 = vadd.f32 0.0, %v601
      %v603 = vpop.f32.mrb[0].mxu0
      %604 = vmatprep.mubr.bf16.mxu0 0
      %605 = vmatmul.mubr.bf16.gmra.mrb[0].mxu0 %v310
      %v606 = vpop.f32.mrb[0].mxu0
      %v607 = vadd.f32 0.0, %v606
      %v608 = vpop.f32.mrb[0].mxu0
      %v609 = vpop.f32.mrb[0].mxu0
      %v610 = vpop.f32.mrb[0].mxu0
      %611 = vdwg.mxu0
      %v622 = vrot.slane %v570, 1
      %v623 = vrot.slane %v575, 1
      %v624 = vsel %vm487, %v622, %v623
      %v625 = vrot.slane %v578, 1
      %v626 = vsel %vm487, %v623, %v625
      %v627 = vrot.slane %v583, 1
      %v628 = vsel %vm487, %v625, %v627
      %v629 = vrot.slane %v586, 1
      %v630 = vsel %vm487, %v627, %v629
      %v631 = vrot.slane %v591, 1
      %v632 = vsel %vm487, %v629, %v631
      %v633 = vrot.slane %v594, 1
      %v634 = vsel %vm487, %v631, %v633
      %v635 = vrot.slane %v599, 1
      %v636 = vsel %vm487, %v633, %v635
      %v637 = vrot.slane %v602, 1
      %v638 = vsel %vm487, %v635, %v637
      %v639 = vrot.slane %v607, 1
      %v640 = vsel %vm487, %v637, %v639
      %v650 = vadd.f32 %v516, %v624
      %v651 = vadd.f32 %v517, %v626
      %v652 = vadd.f32 %v518, %v628
      %v653 = vadd.f32 %v519, %v630
      %v654 = vadd.f32 %v520, %v632
      %v655 = vadd.f32 %v521, %v634
      %v656 = vadd.f32 %v522, %v636
      %v657 = vadd.f32 %v523, %v638
      %v658 = vadd.f32 %v524, %v640
      %v659 = vld [vmem:[%s1 + $0x18] sm:$0xf]
      %v660 = vld [vmem:[%s1 + $0x1c] sm:$0xf]
      %v663 = vunpack.c.l.b16 %v659
      %v664 = vunpack.c.l.b16 %v660
      %v665 = vpack.c.b16 %v664, %v663
      %667 = vmatprep.subr.bf16.mxu0 0
      %668 = vmatpush1.bf16.msra.mxu0 %v665
      %669 = vmatprep.subr.bf16.mxu0 0
      %670 = vmatpush1.bf16.msra.mxu0 0
      %671 = vmatprep.subr.bf16.mxu0 0
      %672 = vmatpush1.bf16.msra.mxu0 0
      %673 = vmatprep.subr.bf16.mxu0 0
      %674 = vmatpush1.bf16.msra.mxu0 0
      %675 = vmatprep.subr.bf16.mxu0 0
      %676 = vmatpush1.bf16.msra.mxu0 0
      %677 = vmatprep.subr.bf16.mxu0 0
      %678 = vmatpush1.bf16.msra.mxu0 0
      %679 = vmatprep.subr.bf16.mxu0 0
      %680 = vmatpush1.bf16.msra.mxu0 0
      %681 = vmatprep.subr.bf16.mxu0 0
      %682 = vmatpush1.bf16.msra.mxu0 0
      %683 = vmatprep.subr.bf16.mxu0 0
      %684 = vmatpush1.bf16.msra.mxu0 0
      %685 = vmatprep.subr.bf16.mxu0 0
      %686 = vmatpush1.bf16.msra.mxu0 0
      %687 = vmatprep.subr.bf16.mxu0 0
      %688 = vmatpush1.bf16.msra.mxu0 0
      %689 = vmatprep.subr.bf16.mxu0 0
      %690 = vmatpush1.bf16.msra.mxu0 0
      %691 = vmatprep.subr.bf16.mxu0 0
      %692 = vmatpush1.bf16.msra.mxu0 0
      %693 = vmatprep.subr.bf16.mxu0 0
      %694 = vmatpush1.bf16.msra.mxu0 0
      %695 = vmatprep.subr.bf16.mxu0 0
      %696 = vmatpush1.bf16.msra.mxu0 0
      %697 = vmatprep.subr.bf16.mxu0 0
      %698 = vmatpush1.bf16.msra.mxu0 0
      %699 = vmatprep.mubr.bf16.mxu0 0
      %700 = vmatmul.mubr.bf16.gmra.mrb[0].mxu0 %v295
      %v701 = vpop.f32.mrb[0].mxu0
      %v702 = vpop.f32.mrb[0].mxu0
      %v703 = vpop.f32.mrb[0].mxu0
      %v704 = vadd.f32 0.0, %v703
      %v705 = vpop.f32.mrb[0].mxu0
      %706 = vmatprep.mubr.bf16.mxu0 0
      %707 = vmatmul.mubr.bf16.gmra.mrb[0].mxu0 %v298
      %v708 = vpop.f32.mrb[0].mxu0
      %v709 = vadd.f32 0.0, %v708
      %v710 = vpop.f32.mrb[0].mxu0
      %v711 = vpop.f32.mrb[0].mxu0
      %v712 = vadd.f32 0.0, %v711
      %v713 = vpop.f32.mrb[0].mxu0
      %714 = vmatprep.mubr.bf16.mxu0 0
      %715 = vmatmul.mubr.bf16.gmra.mrb[0].mxu0 %v301
      %v716 = vpop.f32.mrb[0].mxu0
      %v717 = vadd.f32 0.0, %v716
      %v718 = vpop.f32.mrb[0].mxu0
      %v719 = vpop.f32.mrb[0].mxu0
      %v720 = vadd.f32 0.0, %v719
      %v721 = vpop.f32.mrb[0].mxu0
      %722 = vmatprep.mubr.bf16.mxu0 0
      %723 = vmatmul.mubr.bf16.gmra.mrb[0].mxu0 %v304
      %v724 = vpop.f32.mrb[0].mxu0
      %v725 = vadd.f32 0.0, %v724
      %v726 = vpop.f32.mrb[0].mxu0
      %v727 = vpop.f32.mrb[0].mxu0
      %v728 = vadd.f32 0.0, %v727
      %v729 = vpop.f32.mrb[0].mxu0
      %730 = vmatprep.mubr.bf16.mxu0 0
      %731 = vmatmul.mubr.bf16.gmra.mrb[0].mxu0 %v307
      %v732 = vpop.f32.mrb[0].mxu0
      %v733 = vadd.f32 0.0, %v732
      %v734 = vpop.f32.mrb[0].mxu0
      %v735 = vpop.f32.mrb[0].mxu0
      %v736 = vadd.f32 0.0, %v735
      %v737 = vpop.f32.mrb[0].mxu0
      %738 = vmatprep.mubr.bf16.mxu0 0
      %739 = vmatmul.mubr.bf16.gmra.mrb[0].mxu0 %v310
      %v740 = vpop.f32.mrb[0].mxu0
      %v741 = vadd.f32 0.0, %v740
      %v742 = vpop.f32.mrb[0].mxu0
      %v743 = vpop.f32.mrb[0].mxu0
      %v744 = vpop.f32.mrb[0].mxu0
      %745 = vdwg.mxu0
      %vm756 = vcmask 1045504
      %v757 = vrot.slane %v704, 2
      %v758 = vrot.slane %v709, 2
      %v759 = vsel %vm756, %v757, %v758
      %v760 = vrot.slane %v712, 2
      %v761 = vsel %vm756, %v758, %v760
      %v762 = vrot.slane %v717, 2
      %v763 = vsel %vm756, %v760, %v762
      %v764 = vrot.slane %v720, 2
      %v765 = vsel %vm756, %v762, %v764
      %v766 = vrot.slane %v725, 2
      %v767 = vsel %vm756, %v764, %v766
      %v768 = vrot.slane %v728, 2
      %v769 = vsel %vm756, %v766, %v768
      %v770 = vrot.slane %v733, 2
      %v771 = vsel %vm756, %v768, %v770
      %v772 = vrot.slane %v736, 2
      %v773 = vsel %vm756, %v770, %v772
      %v774 = vrot.slane %v741, 2
      %v775 = vsel %vm756, %v772, %v774
      %v785 = vadd.f32 %v650, %v759
      %v786 = vadd.f32 %v651, %v761
      %v787 = vadd.f32 %v652, %v763
      %v788 = vadd.f32 %v653, %v765
      %v789 = vadd.f32 %v654, %v767
      %v790 = vadd.f32 %v655, %v769
      %v791 = vadd.f32 %v656, %v771
      %v792 = vadd.f32 %v657, %v773
      %v793 = vadd.f32 %v658, %v775
      %p794 = scmp.eq.s32.totalorder %s20, 0
      // Predicated region
      $region41: #{patcher_forward.2} parent=39 // pred_check
        %p795 = pneg %p794
      $region42: #{patcher_forward.2} parent=39 // pred_check_branch
        %797 = sbr.rel (%p795) target = $region44
      $region43: #{patcher_forward.2} parent=39 // pred_region
        %p798 = scmp.eq.s32.totalorder %s21, 0
        // Predicated region
        $region45: #{patcher_forward.2} parent=43 // pred_check
          %p799 = pneg %p798
        $region46: #{patcher_forward.2} parent=43 // pred_check_branch
          %801 = sbr.rel (%p799) target = $region48
        $region47: #{patcher_forward.2} parent=43 // pred_region
          %vm802 = vcmask 516096
          %803 = vst.msk [vmem:[#allocation2] sm:$0x1] %vm802, 0.0
          %804 = vst.msk [vmem:[#allocation3] sm:$0x1] %vm802, 0.0
        $region48: #{patcher_forward.2} parent=43 // pred_fallthru
          _
        %v805 = vld [vmem:[%s4] sm:$0xff]
        %v806 = vld [vmem:[%s4 + $0x8] sm:$0xff]
        %v807 = vld [vmem:[%s4 + $0x10] sm:$0xff]
        %v808 = vld [vmem:[%s4 + $0x18] sm:$0xff]
        %v809 = vld [vmem:[%s4 + $0x20] sm:$0xff]
        %v810 = vld [vmem:[%s4 + $0x28] sm:$0xff]
        %v811 = vld [vmem:[%s4 + $0x30] sm:$0xff]
        %v812 = vld [vmem:[%s4 + $0x38] sm:$0xff]
        %v813 = vld [vmem:[%s4 + $0x40] sm:$0xff]
        %815 = vset.pattern.permute.xlu0 0
        %816 = vperm.xlu0 %815, %v805
        %v817 = vpop.permute.xlu0 %816
        %820 = vset.pattern.permute.xlu0 0
        %821 = vperm.xlu0 %820, %v806
        %v822 = vpop.permute.xlu0 %821
        %825 = vset.pattern.permute.xlu0 0
        %826 = vperm.xlu0 %825, %v807
        %v827 = vpop.permute.xlu0 %826
        %830 = vset.pattern.permute.xlu0 0
        %831 = vperm.xlu0 %830, %v808
        %v832 = vpop.permute.xlu0 %831
        %835 = vset.pattern.permute.xlu0 0
        %836 = vperm.xlu0 %835, %v809
        %v837 = vpop.permute.xlu0 %836
        %840 = vset.pattern.permute.xlu0 0
        %841 = vperm.xlu0 %840, %v810
        %v842 = vpop.permute.xlu0 %841
        %845 = vset.pattern.permute.xlu0 0
        %846 = vperm.xlu0 %845, %v811
        %v847 = vpop.permute.xlu0 %846
        %850 = vset.pattern.permute.xlu0 0
        %851 = vperm.xlu0 %850, %v812
        %v852 = vpop.permute.xlu0 %851
        %855 = vset.pattern.permute.xlu0 0
        %856 = vperm.xlu0 %855, %v813
        %v857 = vpop.permute.xlu0 %856
        %v859 = vmul.f32 %v785, %v817
        %v860 = vmul.f32 %v786, %v822
        %v861 = vmul.f32 %v787, %v827
        %v862 = vmul.f32 %v788, %v832
        %v863 = vmul.f32 %v789, %v837
        %v864 = vmul.f32 %v790, %v842
        %v865 = vmul.f32 %v791, %v847
        %v866 = vmul.f32 %v792, %v852
        %v867 = vmul.f32 %v793, %v857
        %v868 = vld [vmem:[#allocation2] sm:$0x1]
        %vm869 = vcmask 523264
        %v870 = vsel %vm869, %v859, 0.0
        %v871 = vsel %vm869, %v860, 0.0
        %v872 = vadd.f32 %v870, %v871
        %v873 = vsel %vm869, %v861, 0.0
        %v874 = vadd.f32 %v872, %v873
        %v875 = vsel %vm869, %v862, 0.0
        %v876 = vadd.f32 %v874, %v875
        %v877 = vsel %vm869, %v863, 0.0
        %v878 = vadd.f32 %v876, %v877
        %v879 = vsel %vm869, %v864, 0.0
        %v880 = vadd.f32 %v878, %v879
        %v881 = vsel %vm869, %v865, 0.0
        %v882 = vadd.f32 %v880, %v881
        %v883 = vsel %vm869, %v866, 0.0
        %v884 = vadd.f32 %v882, %v883
        %v885 = vsel %vm869, %v867, 0.0
        %v886 = vadd.f32 %v884, %v885
        %v887 = vrot.slane %v886, 4
        %v888 = vadd.f32 %v886, %v887
        %v889 = vrot.slane %v888, 2
        %v890 = vadd.f32 %v888, %v889
        %v891 = vrot.slane %v890, 1
        %v892 = vadd.f32 %v890, %v891
        %v893 = vadd.f32 %v868, %v892
        %vm894 = vcmask 516096
        %895 = vst.msk [vmem:[#allocation2] sm:$0x1] %vm894, %v893
        %v896 = vld [vmem:[#allocation3] sm:$0x1]
        %v897 = vmul.f32 %v859, %v859
        %v898 = vmul.f32 %v860, %v860
        %v899 = vmul.f32 %v861, %v861
        %v900 = vmul.f32 %v862, %v862
        %v901 = vmul.f32 %v863, %v863
        %v902 = vmul.f32 %v864, %v864
        %v903 = vmul.f32 %v865, %v865
        %v904 = vmul.f32 %v866, %v866
        %v905 = vmul.f32 %v867, %v867
        %v906 = vsel %vm869, %v897, 0.0
        %v907 = vsel %vm869, %v898, 0.0
        %v908 = vadd.f32 %v906, %v907
        %v909 = vsel %vm869, %v899, 0.0
        %v910 = vadd.f32 %v908, %v909
        %v911 = vsel %vm869, %v900, 0.0
        %v912 = vadd.f32 %v910, %v911
        %v913 = vsel %vm869, %v901, 0.0
        %v914 = vadd.f32 %v912, %v913
        %v915 = vsel %vm869, %v902, 0.0
        %v916 = vadd.f32 %v914, %v915
        %v917 = vsel %vm869, %v903, 0.0
        %v918 = vadd.f32 %v916, %v917
        %v919 = vsel %vm869, %v904, 0.0
        %v920 = vadd.f32 %v918, %v919
        %v921 = vsel %vm869, %v905, 0.0
        %v922 = vadd.f32 %v920, %v921
        %v923 = vrot.slane %v922, 4
        %v924 = vadd.f32 %v922, %v923
        %v925 = vrot.slane %v924, 2
        %v926 = vadd.f32 %v924, %v925
        %v927 = vrot.slane %v926, 1
        %v928 = vadd.f32 %v926, %v927
        %v929 = vadd.f32 %v896, %v928
        %930 = vst.msk [vmem:[#allocation3] sm:$0x1] %vm894, %v929
        %p931 = scmp.eq.s32.totalorder %s21, 1
        // Predicated region
        $region49: #{patcher_forward.2} parent=43 // pred_check
          %p932 = pneg %p931
        $region50: #{patcher_forward.2} parent=43 // pred_check_branch
          %934 = sbr.rel (%p932) target = $region52
        $region51: #{patcher_forward.2} parent=43 // pred_region
          %v935 = vld [vmem:[#allocation2] sm:$0x1]
          %v936 = vmul.f32 %v935, 0.0078125
          %v937 = vld [vmem:[#allocation3] sm:$0x1]
          %v938 = vmul.f32 %v937, 0.0078125
          %v939 = vmul.f32 %v936, %v936
          %v940 = vsub.f32 %v938, %v939
          %v941 = vmax.f32 %v940, 0.0
          %v942 = vld [vmem:[%s2] sm:$0x1]
          %v943 = vadd.f32 %v941, 1e-05
          %v944 = vrsqrt.pop %v943
          %v945 = vmul.f32 %v942, %v944
          %946 = vst.msk [vmem:[#allocation4] sm:$0x1] %vm894, %v945
          %v947 = vld [vmem:[%s3] sm:$0x1]
          %v948 = vmul.f32 %v936, %v945
          %v949 = vsub.f32 %v947, %v948
          %950 = vst.msk [vmem:[#allocation5] sm:$0x1] %vm894, %v949
        $region52: #{patcher_forward.2} parent=43 // pred_fallthru
          _
      $region44: #{patcher_forward.2} parent=39 // pred_fallthru
        _
      %p951 = scmp.eq.s32.totalorder %s20, 1
      // Predicated region
      $region53: #{patcher_forward.2} parent=39 // pred_check
        %p952 = pneg %p951
      $region54: #{patcher_forward.2} parent=39 // pred_check_branch
        %954 = sbr.rel (%p952) target = $region56
      $region55: #{patcher_forward.2} parent=39 // pred_region
        %v955 = vld [vmem:[#allocation4] sm:$0x1]
        %v957 = vlaneseq
        %v958 = vshrl.u32 %v957, 7
        %v959 = vsub.s32 0, %v958
        %v960 = vrot.slane %v955, %v959
        %v962 = vmul.f32 %v785, %v960
        %v963 = vmul.f32 %v786, %v960
        %v964 = vmul.f32 %v787, %v960
        %v965 = vmul.f32 %v788, %v960
        %v966 = vmul.f32 %v789, %v960
        %v967 = vmul.f32 %v790, %v960
        %v968 = vmul.f32 %v791, %v960
        %v969 = vmul.f32 %v792, %v960
        %v970 = vmul.f32 %v793, %v960
        %v971 = vld [vmem:[#allocation5] sm:$0x1]
        %v973 = vlaneseq
        %v974 = vshrl.u32 %v973, 7
        %v975 = vsub.s32 0, %v974
        %v976 = vrot.slane %v971, %v975
        %v978 = vadd.f32 %v962, %v976
        %v979 = vadd.f32 %v963, %v976
        %v980 = vadd.f32 %v964, %v976
        %v981 = vadd.f32 %v965, %v976
        %v982 = vadd.f32 %v966, %v976
        %v983 = vadd.f32 %v967, %v976
        %v984 = vadd.f32 %v968, %v976
        %v985 = vadd.f32 %v969, %v976
        %v986 = vadd.f32 %v970, %v976
        %v987 = vmax.f32 %v978, 0.0
        %v988 = vmax.f32 %v979, 0.0
        %v989 = vmax.f32 %v980, 0.0
        %v990 = vmax.f32 %v981, 0.0
        %v991 = vmax.f32 %v982, 0.0
        %v992 = vmax.f32 %v983, 0.0
        %v993 = vmax.f32 %v984, 0.0
        %v994 = vmax.f32 %v985, 0.0
        %v995 = vmax.f32 %v986, 0.0
        %v996 = vpack.c.bf16 %v988, %v987
        %v997 = vpack.c.bf16 %v990, %v989
        %v998 = vpack.c.bf16 %v992, %v991
        %v999 = vpack.c.bf16 %v994, %v993
        %v1000 = vpack.c.bf16 %v995, %v995
        %v1006 = vunpack.c.l.b16 %v996
        %v1007 = vunpack.c.h.b16 %v996
        %v1008 = vunpack.c.l.b16 %v997
        %v1009 = vunpack.c.h.b16 %v997
        %v1010 = vunpack.c.l.b16 %v998
        %v1011 = vunpack.c.h.b16 %v998
        %v1012 = vunpack.c.l.b16 %v999
        %v1013 = vunpack.c.h.b16 %v999
        %v1014 = vunpack.c.l.b16 %v1000
        %v1015 = vpack.c.b16 %v1006, %v1006
        %v1016 = vpack.c.b16 %v1007, %v1007
        %v1017 = vpack.c.b16 %v1008, %v1008
        %v1018 = vpack.c.b16 %v1009, %v1009
        %v1019 = vpack.c.b16 %v1010, %v1010
        %v1020 = vpack.c.b16 %v1011, %v1011
        %v1021 = vpack.c.b16 %v1012, %v1012
        %v1022 = vpack.c.b16 %v1013, %v1013
        %v1023 = vpack.c.b16 %v1014, %v1014
        %vm1033 = vcmask 519168
        %1034 = vst.msk [vmem:[%s240] sm:$0xf] %vm1033, %v1015
        %1035 = vst.msk [vmem:[%s240 + $0x4] sm:$0xf] %vm1033, %v1016
        %1036 = vst.msk [vmem:[%s240 + $0x8] sm:$0xf] %vm1033, %v1017
        %1037 = vst.msk [vmem:[%s240 + $0xc] sm:$0xf] %vm1033, %v1018
        %1038 = vst.msk [vmem:[%s240 + $0x10] sm:$0xf] %vm1033, %v1019
        %1039 = vst.msk [vmem:[%s240 + $0x14] sm:$0xf] %vm1033, %v1020
        %1040 = vst.msk [vmem:[%s240 + $0x18] sm:$0xf] %vm1033, %v1021
        %1041 = vst.msk [vmem:[%s240 + $0x1c] sm:$0xf] %vm1033, %v1022
        %1042 = vst.msk [vmem:[%s240 + $0x20] sm:$0xf] %vm1033, %v1023
      $region56: #{patcher_forward.2} parent=39 // pred_fallthru
        _
      %s1043 = smul.u32 %s20, %s21
      %p1044 = scmp.lt.s32.totalorder %s1043, 1
      %s1045 = scalar_select %p1044, %s1043, 1
      %s1046 = smul.addr %s1045, 9
      %s1047 = smul.addr %s1046, 4
      %s1048 = scalar_lea.vmem %s5, %s1047
      // Predicated region
      $region57: #{patcher_forward.2} parent=39 // pred_check
        %p1049 = pneg %p158
      $region58: #{patcher_forward.2} parent=39 // pred_check_branch
        %1051 = sbr.rel (%p1049) target = $region60
      $region59: #{patcher_forward.2} parent=39 // pred_region
        %s1052 = smul.u32 %s20, %s21
      $region60: #{patcher_forward.2} parent=39 // pred_fallthru
        _
    $region40: #{patcher_forward.2} parent=5 // pred_fallthru
      _
    %p1053 = scmp.le.s32.totalorder 2, %s11
    // Predicated region
    $region61: #{patcher_forward.2} parent=5 // pred_check
      %p1054 = pneg %p1053
    $region62: #{patcher_forward.2} parent=5 // pred_check_branch
      %1056 = sbr.rel (%p1054) target = $region64
    $region63: #{patcher_forward.2} parent=5 // pred_region
      %s1057 = ssub.s32 %s11, 2
      // Predicated region
      $region65: #{patcher_forward.2} parent=63 // pred_check
        %p1058 = pneg %p164
      $region66: #{patcher_forward.2} parent=63 // pred_check_branch
        %1060 = sbr.rel (%p1058) target = $region68
      $region67: #{patcher_forward.2} parent=63 // pred_region
        %s1061 = smul.u32 %s22, %s23
        %p1062 = scmp.lt.s32.totalorder %s1061, 1
        %s1063 = scalar_select %p1062, %s1061, 1
        %s1064 = smul.addr %s1063, 9
        %s1065 = smul.addr %s1064, 4
        %s1066 = scalar_lea.vmem %s5, %s1065
      $region68: #{patcher_forward.2} parent=63 // pred_fallthru
        _
    $region64: #{patcher_forward.2} parent=5 // pred_fallthru
      _
  $region6: #{patcher_forward.2} parent=0 // loop_footer
    %s15 = sadd.s32 1, %s11
  $region7: #{patcher_forward.2} parent=0 // loop_footer_branch
    %10 = sbr.rel target = $region3
  $region8: #{patcher_forward.2} parent=0 // loop_exit
    _

// kernel: patcher_forward.3
$region0: #{patcher_forward.3}
  #allocation0 [shape = 'u32[]', space=smem, size = 0x4, offset = 0x4, fixed_abs, tag = 'smem constant byte address 0x4 - core index']
  #allocation1 [shape = 'u32[144,128]{1,0:T(1,128)}', space=vmem, size = 0x12000, scoped, tag = 'internal scratch']
  #allocation2 [shape = 'f32[1,128]{1,0:T(1,128)}', space=vmem, size = 0x200, scoped, tag = 'scratch operand']
  #allocation3 [shape = 'f32[1,128]{1,0:T(1,128)}', space=vmem, size = 0x200, scoped, tag = 'scratch operand']
  #allocation4 [shape = 'f32[1,128]{1,0:T(1,128)}', space=vmem, size = 0x200, scoped, tag = 'scratch operand']
  #allocation5 [shape = 'f32[1,128]{1,0:T(1,128)}', space=vmem, size = 0x200, scoped, tag = 'scratch operand']
  %s0 = inlined_call_operand.vmem [shape: bf16[2,32,256], index: 0, kind: input, shape index: {}]
  %s1 = inlined_call_operand.vmem [shape: bf16[1024,128], index: 1, kind: input, shape index: {}]
  %s2 = inlined_call_operand.vmem [shape: f32[1,128], index: 2, kind: input, shape index: {}]
  %s3 = inlined_call_operand.vmem [shape: f32[1,128], index: 3, kind: input, shape index: {}]
  %s4 = inlined_call_operand.vmem [shape: f32[20,1], index: 4, kind: input, shape index: {}]
  %s5 = inlined_call_operand.vmem [shape: f32[2,20,128], index: 5, kind: output, shape index: {}]
  %s6 = sld [smem:[#allocation0]]
  $region69: #{patcher_forward.3} parent=0
    _
  %s8 = ssub.s32 1, %s6
  %s9 = scalar_select 0, %s8, %s6
  loop: start=0, step=1, limit=6
  $region2: #{patcher_forward.3} parent=0 // loop_pre_header
    _
  $region3: #{patcher_forward.3} parent=0 // loop_header
    %s11 = sphi 0, %s15
    %p12 = scmp.ge.s32.totalorder %s11, 6
    %s18 = sphi 0, %s30
    %s19 = sphi 0, %s26
    %s20 = sphi 0, %s18
    %s21 = sphi 0, %s19
    %s22 = sphi 0, %s20
    %s23 = sphi 0, %s21
    %s33 = sphi 0, %s35
    %s36 = sphi 0, %s33
    %s37 = sphi 0, %s36
    %s53 = sphi 0, %s37
    %s57 = sphi 0, %s57
    %s59 = sphi 0, %s57
    %s60 = sphi 0, %s59
    %s74 = sphi 0, %s60
    %s78 = sphi 0, %s78
    %s80 = sphi 0, %s78
    %s81 = sphi 0, %s80
    %s95 = sphi 0, %s81
    %s99 = sphi 0, %s99
    %s101 = sphi 0, %s99
    %s102 = sphi 0, %s101
    %s116 = sphi 0, %s102
    %s120 = sphi 0, %s120
    %s122 = sphi 0, %s120
    %s123 = sphi 0, %s122
    %s137 = sphi 0, %s123
    %s145 = sphi 0, %s147
    %s148 = sphi 0, %s145
    %s149 = sphi 0, %s148
    %s165 = sphi 0, %s149
  $region4: #{patcher_forward.3} parent=0 // loop_header_branch
    %14 = sbr.rel (%p12) target = $region8
  $region5: #{patcher_forward.3} parent=0 // loop_body
    %s16 = ssub.s32 %s11, 1
    %s17 = ssub.s32 %s11, 2
    %s24 = sadd.s32 1, %s19
    %p25 = scmp.ge.s32.totalorder %s24, 2
    %s26 = scalar_select %p25, 0, %s24
    %s27 = sadd.s32 1, %s18
    %s28 = scalar_select %p25, %s27, %s18
    %p29 = scmp.ge.s32.totalorder %s28, 2
    %s30 = scalar_select %p29, 0, %s28
    %s31 = ssub.s32 %s19, %s26
    %p32 = scmp.eq.s32.totalorder %s31, 0
    %s34 = sadd.s32 %s33, 1
    %s35 = scalar_select %p32, %s33, %s34
    %p38 = pneg %p32
    %p39 = scmp.eq.s32.totalorder %s11, 3
    %p40 = por %p38, %p39
    %p41 = scmp.ne.s32.totalorder %s33, %s36
    %p42 = scmp.eq.s32.totalorder %s11, 0
    %p43 = por %p41, %p42
    %p44 = scmp.ne.s32.totalorder %s33, %s36
    %p45 = scmp.eq.s32.totalorder %s16, 3
    %p46 = por %p44, %p45
    %p47 = scmp.ne.s32.totalorder %s36, %s37
    %p48 = scmp.eq.s32.totalorder %s16, 0
    %p49 = por %p47, %p48
    %p50 = scmp.ne.s32.totalorder %s36, %s37
    %p51 = scmp.eq.s32.totalorder %s17, 3
    %p52 = por %p50, %p51
    %p54 = scmp.ne.s32.totalorder %s37, %s53
    %p55 = scmp.eq.s32.totalorder %s17, 0
    %p56 = por %p54, %p55
    %s58 = sadd.s32 %s57, 1
    %p61 = scmp.eq.s32.totalorder %s11, 3
    %p62 = scmp.ne.s32.totalorder %s57, %s59
    %p63 = scmp.eq.s32.totalorder %s11, 0
    %p64 = por %p62, %p63
    %p65 = scmp.ne.s32.totalorder %s57, %s59
    %p66 = scmp.eq.s32.totalorder %s16, 3
    %p67 = por %p65, %p66
    %p68 = scmp.ne.s32.totalorder %s59, %s60
    %p69 = scmp.eq.s32.totalorder %s16, 0
    %p70 = por %p68, %p69
    %p71 = scmp.ne.s32.totalorder %s59, %s60
    %p72 = scmp.eq.s32.totalorder %s17, 3
    %p73 = por %p71, %p72
    %p75 = scmp.ne.s32.totalorder %s60, %s74
    %p76 = scmp.eq.s32.totalorder %s17, 0
    %p77 = por %p75, %p76
    %s79 = sadd.s32 %s78, 1
    %p82 = scmp.eq.s32.totalorder %s11, 3
    %p83 = scmp.ne.s32.totalorder %s78, %s80
    %p84 = scmp.eq.s32.totalorder %s11, 0
    %p85 = por %p83, %p84
    %p86 = scmp.ne.s32.totalorder %s78, %s80
    %p87 = scmp.eq.s32.totalorder %s16, 3
    %p88 = por %p86, %p87
    %p89 = scmp.ne.s32.totalorder %s80, %s81
    %p90 = scmp.eq.s32.totalorder %s16, 0
    %p91 = por %p89, %p90
    %p92 = scmp.ne.s32.totalorder %s80, %s81
    %p93 = scmp.eq.s32.totalorder %s17, 3
    %p94 = por %p92, %p93
    %p96 = scmp.ne.s32.totalorder %s81, %s95
    %p97 = scmp.eq.s32.totalorder %s17, 0
    %p98 = por %p96, %p97
    %s100 = sadd.s32 %s99, 1
    %p103 = scmp.eq.s32.totalorder %s11, 3
    %p104 = scmp.ne.s32.totalorder %s99, %s101
    %p105 = scmp.eq.s32.totalorder %s11, 0
    %p106 = por %p104, %p105
    %p107 = scmp.ne.s32.totalorder %s99, %s101
    %p108 = scmp.eq.s32.totalorder %s16, 3
    %p109 = por %p107, %p108
    %p110 = scmp.ne.s32.totalorder %s101, %s102
    %p111 = scmp.eq.s32.totalorder %s16, 0
    %p112 = por %p110, %p111
    %p113 = scmp.ne.s32.totalorder %s101, %s102
    %p114 = scmp.eq.s32.totalorder %s17, 3
    %p115 = por %p113, %p114
    %p117 = scmp.ne.s32.totalorder %s102, %s116
    %p118 = scmp.eq.s32.totalorder %s17, 0
    %p119 = por %p117, %p118
    %s121 = sadd.s32 %s120, 1
    %p124 = scmp.eq.s32.totalorder %s11, 3
    %p125 = scmp.ne.s32.totalorder %s120, %s122
    %p126 = scmp.eq.s32.totalorder %s11, 0
    %p127 = por %p125, %p126
    %p128 = scmp.ne.s32.totalorder %s120, %s122
    %p129 = scmp.eq.s32.totalorder %s16, 3
    %p130 = por %p128, %p129
    %p131 = scmp.ne.s32.totalorder %s122, %s123
    %p132 = scmp.eq.s32.totalorder %s16, 0
    %p133 = por %p131, %p132
    %p134 = scmp.ne.s32.totalorder %s122, %s123
    %p135 = scmp.eq.s32.totalorder %s17, 3
    %p136 = por %p134, %p135
    %p138 = scmp.ne.s32.totalorder %s123, %s137
    %p139 = scmp.eq.s32.totalorder %s17, 0
    %p140 = por %p138, %p139
    %s141 = smul.u32 %s18, %s19
    %s142 = smul.u32 %s30, %s26
    %s143 = ssub.s32 %s141, %s142
    %p144 = scmp.eq.s32.totalorder %s143, 0
    %s146 = sadd.s32 %s145, 1
    %s147 = scalar_select %p144, %s145, %s146
    %p150 = pneg %p144
    %p151 = scmp.eq.s32.totalorder %s11, 3
    %p152 = por %p150, %p151
    %p153 = scmp.ne.s32.totalorder %s145, %s148
    %p154 = scmp.eq.s32.totalorder %s11, 0
    %p155 = por %p153, %p154
    %p156 = scmp.ne.s32.totalorder %s145, %s148
    %p157 = scmp.eq.s32.totalorder %s16, 3
    %p158 = por %p156, %p157
    %p159 = scmp.ne.s32.totalorder %s148, %s149
    %p160 = scmp.eq.s32.totalorder %s16, 0
    %p161 = por %p159, %p160
    %p162 = scmp.ne.s32.totalorder %s148, %s149
    %p163 = scmp.eq.s32.totalorder %s17, 3
    %p164 = por %p162, %p163
    %p166 = scmp.ne.s32.totalorder %s149, %s165
    %p167 = scmp.eq.s32.totalorder %s17, 0
    %p168 = por %p166, %p167
    %p169 = scmp.le.s32.totalorder 1, %s11
    %p170 = scmp.lt.s32.totalorder %s11, 5
    %p171 = pnand %p169, %p170
    %p172 = pneg %p171
    // Predicated region
    $region9: #{patcher_forward.3} parent=5 // pred_check
      _
    $region10: #{patcher_forward.3} parent=5 // pred_check_branch
      %174 = sbr.rel (%p171) target = $region12
    $region11: #{patcher_forward.3} parent=5 // pred_region
      %s175 = ssub.s32 %s11, 1
      // Predicated region
      $region13: #{patcher_forward.3} parent=11 // pred_check
        %p176 = pneg %p70
      $region14: #{patcher_forward.3} parent=11 // pred_check_branch
        %178 = sbr.rel (%p176) target = $region16
      $region15: #{patcher_forward.3} parent=11 // pred_region
        _
      $region16: #{patcher_forward.3} parent=11 // pred_fallthru
        _
      // Predicated region
      $region17: #{patcher_forward.3} parent=11 // pred_check
        %p179 = pneg %p91
      $region18: #{patcher_forward.3} parent=11 // pred_check_branch
        %181 = sbr.rel (%p179) target = $region20
      $region19: #{patcher_forward.3} parent=11 // pred_region
        _
      $region20: #{patcher_forward.3} parent=11 // pred_fallthru
        _
      // Predicated region
      $region21: #{patcher_forward.3} parent=11 // pred_check
        %p182 = pneg %p112
      $region22: #{patcher_forward.3} parent=11 // pred_check_branch
        %184 = sbr.rel (%p182) target = $region24
      $region23: #{patcher_forward.3} parent=11 // pred_region
        _
      $region24: #{patcher_forward.3} parent=11 // pred_fallthru
        _
      // Predicated region
      $region25: #{patcher_forward.3} parent=11 // pred_check
        %p185 = pneg %p133
      $region26: #{patcher_forward.3} parent=11 // pred_check_branch
        %187 = sbr.rel (%p185) target = $region28
      $region27: #{patcher_forward.3} parent=11 // pred_region
        _
      $region28: #{patcher_forward.3} parent=11 // pred_fallthru
        _
    $region12: #{patcher_forward.3} parent=5 // pred_fallthru
      _
    %p188 = scmp.lt.s32.totalorder %s11, 4
    // Predicated region
    $region29: #{patcher_forward.3} parent=5 // pred_check
      %p189 = pneg %p188
    $region30: #{patcher_forward.3} parent=5 // pred_check_branch
      %191 = sbr.rel (%p189) target = $region32
    $region31: #{patcher_forward.3} parent=5 // pred_region
      // Predicated region
      $region33: #{patcher_forward.3} parent=31 // pred_check
        %p192 = pneg %p43
      $region34: #{patcher_forward.3} parent=31 // pred_check_branch
        %194 = sbr.rel (%p192) target = $region36
      $region35: #{patcher_forward.3} parent=31 // pred_region
        %p195 = scmp.lt.s32.totalorder %s19, 1
        %s196 = scalar_select %p195, %s19, 1
        %s197 = smul.addr %s196, 8
        %s198 = smul.addr %s197, 4
        %s199 = scalar_lea.vmem %s0, %s198
      $region36: #{patcher_forward.3} parent=31 // pred_fallthru
        _
    $region32: #{patcher_forward.3} parent=5 // pred_fallthru
      _
    %p200 = scmp.le.s32.totalorder 1, %s11
    %p201 = scmp.lt.s32.totalorder %s11, 5
    %p202 = pnand %p200, %p201
    %p203 = pneg %p202
    // Predicated region
    $region37: #{patcher_forward.3} parent=5 // pred_check
      _
    $region38: #{patcher_forward.3} parent=5 // pred_check_branch
      %205 = sbr.rel (%p202) target = $region40
    $region39: #{patcher_forward.3} parent=5 // pred_region
      %s206 = ssub.s32 %s11, 1
      %p207 = scmp.lt.s32.totalorder %s21, 1
      %s208 = scalar_select %p207, %s21, 1
      %s209 = smul.addr %s208, 8
      %s210 = smul.addr %s209, 4
      %s211 = scalar_lea.vmem %s0, %s210
      %p212 = pneg %p49
      %p213 = pneg %p46
      %p214 = pneg %p70
      %p215 = pneg %p67
      %p216 = pneg %p91
      %p217 = pneg %p88
      %p218 = pneg %p112
      %p219 = pneg %p109
      %p220 = pneg %p133
      %p221 = pneg %p130
      %p222 = pneg %p161
      %p223 = pneg %p158
      %s224 = smul.u32 %s20, %s21
      %p225 = scmp.lt.s32.totalorder %s224, 1
      %s226 = scalar_select %p225, %s224, 1
      %s227 = smul.addr %s226, 3
      %s228 = smul.addr %s227, 8
      %s229 = scalar_lea.vmem %s5, %s228
      %p230 = scmp.lt.s32.totalorder %s21, 1
      %s231 = scalar_select %p230, %s21, 1
      %s232 = smul.addr %s231, 8
      %s233 = smul.addr %s232, 4
      %s234 = scalar_lea.vmem %s0, %s233
      %s235 = smul.u32 %s20, %s21
      %p236 = scmp.lt.s32.totalorder %s235, 1
      %s237 = scalar_select %p236, %s235, 1
      %s238 = smul.addr %s237, 3
      %s239 = smul.addr %s238, 8
      %s240 = scalar_lea.vmem %s5, %s239
      %s241 = smul.u32 %s20, %s21
      %v243 = vld [vmem:[%s234] sm:$0xff]
      %v244 = vld [vmem:[%s234 + $0x8] sm:$0xff]
      %v245 = vld [vmem:[%s234 + $0x10] sm:$0xff]
      %v246 = vld [vmem:[%s234 + $0x18] sm:$0xff]
      %v247 = vld [vmem:[%s1] sm:$0xf]
      %v248 = vld [vmem:[%s1 + $0x4] sm:$0xf]
      %v249 = vld [vmem:[%s1 + $0x8] sm:$0xf]
      %v250 = vld [vmem:[%s1 + $0xc] sm:$0xf]
      %v251 = vld [vmem:[%s1 + $0x10] sm:$0xf]
      %v252 = vld [vmem:[%s1 + $0x14] sm:$0xf]
      %v253 = vld [vmem:[%s1 + $0x18] sm:$0xf]
      %v254 = vld [vmem:[%s1 + $0x1c] sm:$0xf]
      %v255 = vld [vmem:[%s1 + $0x20] sm:$0xf]
      %v256 = vld [vmem:[%s1 + $0x24] sm:$0xf]
      %v257 = vld [vmem:[%s1 + $0x28] sm:$0xf]
      %v258 = vld [vmem:[%s1 + $0x2c] sm:$0xf]
      %v259 = vld [vmem:[%s1 + $0x30] sm:$0xf]
      %v260 = vld [vmem:[%s1 + $0x34] sm:$0xf]
      %v261 = vld [vmem:[%s1 + $0x38] sm:$0xf]
      %v262 = vld [vmem:[%s1 + $0x3c] sm:$0xf]
      %v263 = vld [vmem:[%s1 + $0x40] sm:$0xf]
      %v264 = vld [vmem:[%s1 + $0x44] sm:$0xf]
      %v265 = vld [vmem:[%s1 + $0x48] sm:$0xf]
      %v266 = vld [vmem:[%s1 + $0x4c] sm:$0xf]
      %v267 = vld [vmem:[%s1 + $0x50] sm:$0xf]
      %v268 = vld [vmem:[%s1 + $0x54] sm:$0xf]
      %v269 = vld [vmem:[%s1 + $0x58] sm:$0xf]
      %v270 = vld [vmem:[%s1 + $0x5c] sm:$0xf]
      %v271 = vld [vmem:[%s1 + $0x60] sm:$0xf]
      %v272 = vld [vmem:[%s1 + $0x64] sm:$0xf]
      %v273 = vld [vmem:[%s1 + $0x68] sm:$0xf]
      %v274 = vld [vmem:[%s1 + $0x6c] sm:$0xf]
      %v275 = vld [vmem:[%s1 + $0x70] sm:$0xf]
      %v276 = vld [vmem:[%s1 + $0x74] sm:$0xf]
      %v277 = vld [vmem:[%s1 + $0x78] sm:$0xf]
      %v278 = vld [vmem:[%s1 + $0x7c] sm:$0xf]
      %v283 = vunpack.c.l.b16 %v243
      %v284 = vunpack.c.h.b16 %v243
      %v285 = vunpack.c.l.b16 %v244
      %v286 = vunpack.c.h.b16 %v244
      %v287 = vunpack.c.l.b16 %v245
      %v288 = vunpack.c.h.b16 %v245
      %v289 = vunpack.c.l.b16 %v246
      %v290 = vunpack.c.h.b16 %v246
      %v291 = vpack.c.b16 %v285, %v283
      %v292 = vpack.c.b16 %v286, %v284
      %v293 = vpack.c.b16 %v289, %v287
      %v294 = vpack.c.b16 %v290, %v288
      %v331 = vunpack.c.l.b16 %v247
      %v332 = vunpack.c.l.b16 %v248
      %v333 = vunpack.c.l.b16 %v249
      %v334 = vunpack.c.l.b16 %v250
      %v335 = vunpack.c.l.b16 %v251
      %v336 = vunpack.c.l.b16 %v252
      %v337 = vunpack.c.l.b16 %v253
      %v338 = vunpack.c.l.b16 %v254
      %v339 = vunpack.c.l.b16 %v255
      %v340 = vunpack.c.l.b16 %v256
      %v341 = vunpack.c.l.b16 %v257
      %v342 = vunpack.c.l.b16 %v258
      %v343 = vunpack.c.l.b16 %v259
      %v344 = vunpack.c.l.b16 %v260
      %v345 = vunpack.c.l.b16 %v261
      %v346 = vunpack.c.l.b16 %v262
      %v347 = vunpack.c.l.b16 %v263
      %v348 = vunpack.c.l.b16 %v264
      %v349 = vunpack.c.l.b16 %v265
      %v350 = vunpack.c.l.b16 %v266
      %v351 = vunpack.c.l.b16 %v267
      %v352 = vunpack.c.l.b16 %v268
      %v353 = vunpack.c.l.b16 %v269
      %v354 = vunpack.c.l.b16 %v270
      %v355 = vunpack.c.l.b16 %v271
      %v356 = vunpack.c.l.b16 %v272
      %v357 = vunpack.c.l.b16 %v273
      %v358 = vunpack.c.l.b16 %v274
      %v359 = vunpack.c.l.b16 %v275
      %v360 = vunpack.c.l.b16 %v276
      %v361 = vunpack.c.l.b16 %v277
      %v362 = vunpack.c.l.b16 %v278
      %v363 = vpack.c.b16 %v332, %v331
      %v364 = vpack.c.b16 %v334, %v333
      %v365 = vpack.c.b16 %v336, %v335
      %v366 = vpack.c.b16 %v338, %v337
      %v367 = vpack.c.b16 %v340, %v339
      %v368 = vpack.c.b16 %v342, %v341
      %v369 = vpack.c.b16 %v344, %v343
      %v370 = vpack.c.b16 %v346, %v345
      %v371 = vpack.c.b16 %v348, %v347
      %v372 = vpack.c.b16 %v350, %v349
      %v373 = vpack.c.b16 %v352, %v351
      %v374 = vpack.c.b16 %v354, %v353
      %v375 = vpack.c.b16 %v356, %v355
      %v376 = vpack.c.b16 %v358, %v357
      %v377 = vpack.c.b16 %v360, %v359
      %v378 = vpack.c.b16 %v362, %v361
      %395 = vmatprep.subr.bf16.mxu0 0
      %396 = vmatpush1.bf16.msra.mxu0 %v363
      %397 = vmatprep.subr.bf16.mxu0 0
      %398 = vmatpush1.bf16.msra.mxu0 %v364
      %399 = vmatprep.subr.bf16.mxu0 0
      %400 = vmatpush1.bf16.msra.mxu0 %v365
      %401 = vmatprep.subr.bf16.mxu0 0
      %402 = vmatpush1.bf16.msra.mxu0 %v366
      %403 = vmatprep.subr.bf16.mxu0 0
      %404 = vmatpush1.bf16.msra.mxu0 %v367
      %405 = vmatprep.subr.bf16.mxu0 0
      %406 = vmatpush1.bf16.msra.mxu0 %v368
      %407 = vmatprep.subr.bf16.mxu0 0
      %408 = vmatpush1.bf16.msra.mxu0 %v369
      %409 = vmatprep.subr.bf16.mxu0 0
      %410 = vmatpush1.bf16.msra.mxu0 %v370
      %411 = vmatprep.subr.bf16.mxu0 0
      %412 = vmatpush1.bf16.msra.mxu0 %v371
      %413 = vmatprep.subr.bf16.mxu0 0
      %414 = vmatpush1.bf16.msra.mxu0 %v372
      %415 = vmatprep.subr.bf16.mxu0 0
      %416 = vmatpush1.bf16.msra.mxu0 %v373
      %417 = vmatprep.subr.bf16.mxu0 0
      %418 = vmatpush1.bf16.msra.mxu0 %v374
      %419 = vmatprep.subr.bf16.mxu0 0
      %420 = vmatpush1.bf16.msra.mxu0 %v375
      %421 = vmatprep.subr.bf16.mxu0 0
      %422 = vmatpush1.bf16.msra.mxu0 %v376
      %423 = vmatprep.subr.bf16.mxu0 0
      %424 = vmatpush1.bf16.msra.mxu0 %v377
      %425 = vmatprep.subr.bf16.mxu0 0
      %426 = vmatpush1.bf16.msra.mxu0 %v378
      %427 = vmatprep.mubr.bf16.mxu0 %v292
      %428 = vmatmul.mubr.bf16.gmra.mrb[0].mxu0 %v291
      %v429 = vpop.f32.mrb[0].mxu0
      %v430 = vadd.f32 0.0, %v429
      %v431 = vpop.f32.mrb[0].mxu0
      %v432 = vpop.f32.mrb[0].mxu0
      %v433 = vadd.f32 0.0, %v432
      %v434 = vpop.f32.mrb[0].mxu0
      %435 = vmatprep.mubr.bf16.mxu0 %v294
      %436 = vmatmul.mubr.bf16.gmra.mrb[0].mxu0 %v293
      %v437 = vpop.f32.mrb[0].mxu0
      %v438 = vadd.f32 0.0, %v437
      %v439 = vpop.f32.mrb[0].mxu0
      %v440 = vpop.f32.mrb[0].mxu0
      %v441 = vpop.f32.mrb[0].mxu0
      %442 = vdwg.mxu0
      %v443 = vld [vmem:[%s1 + $0x80] sm:$0xf]
      %v444 = vld [vmem:[%s1 + $0x84] sm:$0xf]
      %v445 = vld [vmem:[%s1 + $0x88] sm:$0xf]
      %v446 = vld [vmem:[%s1 + $0x8c] sm:$0xf]
      %v447 = vld [vmem:[%s1 + $0x90] sm:$0xf]
      %v448 = vld [vmem:[%s1 + $0x94] sm:$0xf]
      %v449 = vld [vmem:[%s1 + $0x98] sm:$0xf]
      %v450 = vld [vmem:[%s1 + $0x9c] sm:$0xf]
      %v451 = vld [vmem:[%s1 + $0xa0] sm:$0xf]
      %v452 = vld [vmem:[%s1 + $0xa4] sm:$0xf]
      %v453 = vld [vmem:[%s1 + $0xa8] sm:$0xf]
      %v454 = vld [vmem:[%s1 + $0xac] sm:$0xf]
      %v455 = vld [vmem:[%s1 + $0xb0] sm:$0xf]
      %v456 = vld [vmem:[%s1 + $0xb4] sm:$0xf]
      %v457 = vld [vmem:[%s1 + $0xb8] sm:$0xf]
      %v458 = vld [vmem:[%s1 + $0xbc] sm:$0xf]
      %v459 = vld [vmem:[%s1 + $0xc0] sm:$0xf]
      %v460 = vld [vmem:[%s1 + $0xc4] sm:$0xf]
      %v461 = vld [vmem:[%s1 + $0xc8] sm:$0xf]
      %v462 = vld [vmem:[%s1 + $0xcc] sm:$0xf]
      %v463 = vld [vmem:[%s1 + $0xd0] sm:$0xf]
      %v464 = vld [vmem:[%s1 + $0xd4] sm:$0xf]
      %v465 = vld [vmem:[%s1 + $0xd8] sm:$0xf]
      %v466 = vld [vmem:[%s1 + $0xdc] sm:$0xf]
      %v467 = vld [vmem:[%s1 + $0xe0] sm:$0xf]
      %v468 = vld [vmem:[%s1 + $0xe4] sm:$0xf]
      %v469 = vld [vmem:[%s1 + $0xe8] sm:$0xf]
      %v470 = vld [vmem:[%s1 + $0xec] sm:$0xf]
      %v471 = vld [vmem:[%s1 + $0xf0] sm:$0xf]
      %v472 = vld [vmem:[%s1 + $0xf4] sm:$0xf]
      %v473 = vld [vmem:[%s1 + $0xf8] sm:$0xf]
      %v474 = vld [vmem:[%s1 + $0xfc] sm:$0xf]
      %v507 = vunpack.c.l.b16 %v443
      %v508 = vunpack.c.l.b16 %v444
      %v509 = vunpack.c.l.b16 %v445
      %v510 = vunpack.c.l.b16 %v446
      %v511 = vunpack.c.l.b16 %v447
      %v512 = vunpack.c.l.b16 %v448
      %v513 = vunpack.c.l.b16 %v449
      %v514 = vunpack.c.l.b16 %v450
      %v515 = vunpack.c.l.b16 %v451
      %v516 = vunpack.c.l.b16 %v452
      %v517 = vunpack.c.l.b16 %v453
      %v518 = vunpack.c.l.b16 %v454
      %v519 = vunpack.c.l.b16 %v455
      %v520 = vunpack.c.l.b16 %v456
      %v521 = vunpack.c.l.b16 %v457
      %v522 = vunpack.c.l.b16 %v458
      %v523 = vunpack.c.l.b16 %v459
      %v524 = vunpack.c.l.b16 %v460
      %v525 = vunpack.c.l.b16 %v461
      %v526 = vunpack.c.l.b16 %v462
      %v527 = vunpack.c.l.b16 %v463
      %v528 = vunpack.c.l.b16 %v464
      %v529 = vunpack.c.l.b16 %v465
      %v530 = vunpack.c.l.b16 %v466
      %v531 = vunpack.c.l.b16 %v467
      %v532 = vunpack.c.l.b16 %v468
      %v533 = vunpack.c.l.b16 %v469
      %v534 = vunpack.c.l.b16 %v470
      %v535 = vunpack.c.l.b16 %v471
      %v536 = vunpack.c.l.b16 %v472
      %v537 = vunpack.c.l.b16 %v473
      %v538 = vunpack.c.l.b16 %v474
      %v539 = vpack.c.b16 %v508, %v507
      %v540 = vpack.c.b16 %v510, %v509
      %v541 = vpack.c.b16 %v512, %v511
      %v542 = vpack.c.b16 %v514, %v513
      %v543 = vpack.c.b16 %v516, %v515
      %v544 = vpack.c.b16 %v518, %v517
      %v545 = vpack.c.b16 %v520, %v519
      %v546 = vpack.c.b16 %v522, %v521
      %v547 = vpack.c.b16 %v524, %v523
      %v548 = vpack.c.b16 %v526, %v525
      %v549 = vpack.c.b16 %v528, %v527
      %v550 = vpack.c.b16 %v530, %v529
      %v551 = vpack.c.b16 %v532, %v531
      %v552 = vpack.c.b16 %v534, %v533
      %v553 = vpack.c.b16 %v536, %v535
      %v554 = vpack.c.b16 %v538, %v537
      %571 = vmatprep.subr.bf16.mxu0 0
      %572 = vmatpush1.bf16.msra.mxu0 %v539
      %573 = vmatprep.subr.bf16.mxu0 0
      %574 = vmatpush1.bf16.msra.mxu0 %v540
      %575 = vmatprep.subr.bf16.mxu0 0
      %576 = vmatpush1.bf16.msra.mxu0 %v541
      %577 = vmatprep.subr.bf16.mxu0 0
      %578 = vmatpush1.bf16.msra.mxu0 %v542
      %579 = vmatprep.subr.bf16.mxu0 0
      %580 = vmatpush1.bf16.msra.mxu0 %v543
      %581 = vmatprep.subr.bf16.mxu0 0
      %582 = vmatpush1.bf16.msra.mxu0 %v544
      %583 = vmatprep.subr.bf16.mxu0 0
      %584 = vmatpush1.bf16.msra.mxu0 %v545
      %585 = vmatprep.subr.bf16.mxu0 0
      %586 = vmatpush1.bf16.msra.mxu0 %v546
      %587 = vmatprep.subr.bf16.mxu0 0
      %588 = vmatpush1.bf16.msra.mxu0 %v547
      %589 = vmatprep.subr.bf16.mxu0 0
      %590 = vmatpush1.bf16.msra.mxu0 %v548
      %591 = vmatprep.subr.bf16.mxu0 0
      %592 = vmatpush1.bf16.msra.mxu0 %v549
      %593 = vmatprep.subr.bf16.mxu0 0
      %594 = vmatpush1.bf16.msra.mxu0 %v550
      %595 = vmatprep.subr.bf16.mxu0 0
      %596 = vmatpush1.bf16.msra.mxu0 %v551
      %597 = vmatprep.subr.bf16.mxu0 0
      %598 = vmatpush1.bf16.msra.mxu0 %v552
      %599 = vmatprep.subr.bf16.mxu0 0
      %600 = vmatpush1.bf16.msra.mxu0 %v553
      %601 = vmatprep.subr.bf16.mxu0 0
      %602 = vmatpush1.bf16.msra.mxu0 %v554
      %603 = vmatprep.mubr.bf16.mxu0 %v292
      %604 = vmatmul.mubr.bf16.gmra.mrb[0].mxu0 %v291
      %v605 = vpop.f32.mrb[0].mxu0
      %v606 = vadd.f32 0.0, %v605
      %v607 = vpop.f32.mrb[0].mxu0
      %v608 = vpop.f32.mrb[0].mxu0
      %v609 = vadd.f32 0.0, %v608
      %v610 = vpop.f32.mrb[0].mxu0
      %611 = vmatprep.mubr.bf16.mxu0 %v294
      %612 = vmatmul.mubr.bf16.gmra.mrb[0].mxu0 %v293
      %v613 = vpop.f32.mrb[0].mxu0
      %v614 = vadd.f32 0.0, %v613
      %v615 = vpop.f32.mrb[0].mxu0
      %v616 = vpop.f32.mrb[0].mxu0
      %v617 = vpop.f32.mrb[0].mxu0
      %618 = vdwg.mxu0
      %vm622 = vcmask 1046528
      %v623 = vrot.slane %v606, 1
      %v624 = vrot.slane %v609, 1
      %v625 = vsel %vm622, %v623, %v624
      %v626 = vrot.slane %v614, 1
      %v627 = vsel %vm622, %v624, %v626
      %v631 = vadd.f32 %v430, %v625
      %v632 = vadd.f32 %v433, %v627
      %v633 = vadd.f32 %v438, %v626
      %v634 = vld [vmem:[%s1 + $0x100] sm:$0xf]
      %v635 = vld [vmem:[%s1 + $0x104] sm:$0xf]
      %v636 = vld [vmem:[%s1 + $0x108] sm:$0xf]
      %v637 = vld [vmem:[%s1 + $0x10c] sm:$0xf]
      %v638 = vld [vmem:[%s1 + $0x110] sm:$0xf]
      %v639 = vld [vmem:[%s1 + $0x114] sm:$0xf]
      %v640 = vld [vmem:[%s1 + $0x118] sm:$0xf]
      %v641 = vld [vmem:[%s1 + $0x11c] sm:$0xf]
      %v642 = vld [vmem:[%s1 + $0x120] sm:$0xf]
      %v643 = vld [vmem:[%s1 + $0x124] sm:$0xf]
      %v644 = vld [vmem:[%s1 + $0x128] sm:$0xf]
      %v645 = vld [vmem:[%s1 + $0x12c] sm:$0xf]
      %v646 = vld [vmem:[%s1 + $0x130] sm:$0xf]
      %v647 = vld [vmem:[%s1 + $0x134] sm:$0xf]
      %v648 = vld [vmem:[%s1 + $0x138] sm:$0xf]
      %v649 = vld [vmem:[%s1 + $0x13c] sm:$0xf]
      %v650 = vld [vmem:[%s1 + $0x140] sm:$0xf]
      %v651 = vld [vmem:[%s1 + $0x144] sm:$0xf]
      %v652 = vld [vmem:[%s1 + $0x148] sm:$0xf]
      %v653 = vld [vmem:[%s1 + $0x14c] sm:$0xf]
      %v654 = vld [vmem:[%s1 + $0x150] sm:$0xf]
      %v655 = vld [vmem:[%s1 + $0x154] sm:$0xf]
      %v656 = vld [vmem:[%s1 + $0x158] sm:$0xf]
      %v657 = vld [vmem:[%s1 + $0x15c] sm:$0xf]
      %v658 = vld [vmem:[%s1 + $0x160] sm:$0xf]
      %v659 = vld [vmem:[%s1 + $0x164] sm:$0xf]
      %v660 = vld [vmem:[%s1 + $0x168] sm:$0xf]
      %v661 = vld [vmem:[%s1 + $0x16c] sm:$0xf]
      %v662 = vld [vmem:[%s1 + $0x170] sm:$0xf]
      %v663 = vld [vmem:[%s1 + $0x174] sm:$0xf]
      %v664 = vld [vmem:[%s1 + $0x178] sm:$0xf]
      %v665 = vld [vmem:[%s1 + $0x17c] sm:$0xf]
      %v698 = vunpack.c.l.b16 %v634
      %v699 = vunpack.c.l.b16 %v635
      %v700 = vunpack.c.l.b16 %v636
      %v701 = vunpack.c.l.b16 %v637
      %v702 = vunpack.c.l.b16 %v638
      %v703 = vunpack.c.l.b16 %v639
      %v704 = vunpack.c.l.b16 %v640
      %v705 = vunpack.c.l.b16 %v641
      %v706 = vunpack.c.l.b16 %v642
      %v707 = vunpack.c.l.b16 %v643
      %v708 = vunpack.c.l.b16 %v644
      %v709 = vunpack.c.l.b16 %v645
      %v710 = vunpack.c.l.b16 %v646
      %v711 = vunpack.c.l.b16 %v647
      %v712 = vunpack.c.l.b16 %v648
      %v713 = vunpack.c.l.b16 %v649
      %v714 = vunpack.c.l.b16 %v650
      %v715 = vunpack.c.l.b16 %v651
      %v716 = vunpack.c.l.b16 %v652
      %v717 = vunpack.c.l.b16 %v653
      %v718 = vunpack.c.l.b16 %v654
      %v719 = vunpack.c.l.b16 %v655
      %v720 = vunpack.c.l.b16 %v656
      %v721 = vunpack.c.l.b16 %v657
      %v722 = vunpack.c.l.b16 %v658
      %v723 = vunpack.c.l.b16 %v659
      %v724 = vunpack.c.l.b16 %v660
      %v725 = vunpack.c.l.b16 %v661
      %v726 = vunpack.c.l.b16 %v662
      %v727 = vunpack.c.l.b16 %v663
      %v728 = vunpack.c.l.b16 %v664
      %v729 = vunpack.c.l.b16 %v665
      %v730 = vpack.c.b16 %v699, %v698
      %v731 = vpack.c.b16 %v701, %v700
      %v732 = vpack.c.b16 %v703, %v702
      %v733 = vpack.c.b16 %v705, %v704
      %v734 = vpack.c.b16 %v707, %v706
      %v735 = vpack.c.b16 %v709, %v708
      %v736 = vpack.c.b16 %v711, %v710
      %v737 = vpack.c.b16 %v713, %v712
      %v738 = vpack.c.b16 %v715, %v714
      %v739 = vpack.c.b16 %v717, %v716
      %v740 = vpack.c.b16 %v719, %v718
      %v741 = vpack.c.b16 %v721, %v720
      %v742 = vpack.c.b16 %v723, %v722
      %v743 = vpack.c.b16 %v725, %v724
      %v744 = vpack.c.b16 %v727, %v726
      %v745 = vpack.c.b16 %v729, %v728
      %762 = vmatprep.subr.bf16.mxu0 0
      %763 = vmatpush1.bf16.msra.mxu0 %v730
      %764 = vmatprep.subr.bf16.mxu0 0
      %765 = vmatpush1.bf16.msra.mxu0 %v731
      %766 = vmatprep.subr.bf16.mxu0 0
      %767 = vmatpush1.bf16.msra.mxu0 %v732
      %768 = vmatprep.subr.bf16.mxu0 0
      %769 = vmatpush1.bf16.msra.mxu0 %v733
      %770 = vmatprep.subr.bf16.mxu0 0
      %771 = vmatpush1.bf16.msra.mxu0 %v734
      %772 = vmatprep.subr.bf16.mxu0 0
      %773 = vmatpush1.bf16.msra.mxu0 %v735
      %774 = vmatprep.subr.bf16.mxu0 0
      %775 = vmatpush1.bf16.msra.mxu0 %v736
      %776 = vmatprep.subr.bf16.mxu0 0
      %777 = vmatpush1.bf16.msra.mxu0 %v737
      %778 = vmatprep.subr.bf16.mxu0 0
      %779 = vmatpush1.bf16.msra.mxu0 %v738
      %780 = vmatprep.subr.bf16.mxu0 0
      %781 = vmatpush1.bf16.msra.mxu0 %v739
      %782 = vmatprep.subr.bf16.mxu0 0
      %783 = vmatpush1.bf16.msra.mxu0 %v740
      %784 = vmatprep.subr.bf16.mxu0 0
      %785 = vmatpush1.bf16.msra.mxu0 %v741
      %786 = vmatprep.subr.bf16.mxu0 0
      %787 = vmatpush1.bf16.msra.mxu0 %v742
      %788 = vmatprep.subr.bf16.mxu0 0
      %789 = vmatpush1.bf16.msra.mxu0 %v743
      %790 = vmatprep.subr.bf16.mxu0 0
      %791 = vmatpush1.bf16.msra.mxu0 %v744
      %792 = vmatprep.subr.bf16.mxu0 0
      %793 = vmatpush1.bf16.msra.mxu0 %v745
      %794 = vmatprep.mubr.bf16.mxu0 %v292
      %795 = vmatmul.mubr.bf16.gmra.mrb[0].mxu0 %v291
      %v796 = vpop.f32.mrb[0].mxu0
      %v797 = vadd.f32 0.0, %v796
      %v798 = vpop.f32.mrb[0].mxu0
      %v799 = vpop.f32.mrb[0].mxu0
      %v800 = vadd.f32 0.0, %v799
      %v801 = vpop.f32.mrb[0].mxu0
      %802 = vmatprep.mubr.bf16.mxu0 %v294
      %803 = vmatmul.mubr.bf16.gmra.mrb[0].mxu0 %v293
      %v804 = vpop.f32.mrb[0].mxu0
      %v805 = vadd.f32 0.0, %v804
      %v806 = vpop.f32.mrb[0].mxu0
      %v807 = vpop.f32.mrb[0].mxu0
      %v808 = vadd.f32 0.0, %v807
      %v809 = vpop.f32.mrb[0].mxu0
      %810 = vdwg.mxu0
      %vm815 = vcmask 1042432
      %v816 = vrot.slane %v797, 5
      %v817 = vrot.slane %v800, 5
      %v818 = vsel %vm815, %v816, %v817
      %v819 = vrot.slane %v805, 5
      %v820 = vsel %vm815, %v817, %v819
      %v821 = vrot.slane %v808, 5
      %v822 = vsel %vm815, %v819, %v821
      %v826 = vadd.f32 %v631, %v818
      %v827 = vadd.f32 %v632, %v820
      %v828 = vadd.f32 %v633, %v822
      %v829 = vld [vmem:[%s1 + $0x180] sm:$0xf]
      %v830 = vld [vmem:[%s1 + $0x184] sm:$0xf]
      %v831 = vld [vmem:[%s1 + $0x188] sm:$0xf]
      %v832 = vld [vmem:[%s1 + $0x18c] sm:$0xf]
      %v833 = vld [vmem:[%s1 + $0x190] sm:$0xf]
      %v834 = vld [vmem:[%s1 + $0x194] sm:$0xf]
      %v835 = vld [vmem:[%s1 + $0x198] sm:$0xf]
      %v836 = vld [vmem:[%s1 + $0x19c] sm:$0xf]
      %v837 = vld [vmem:[%s1 + $0x1a0] sm:$0xf]
      %v838 = vld [vmem:[%s1 + $0x1a4] sm:$0xf]
      %v839 = vld [vmem:[%s1 + $0x1a8] sm:$0xf]
      %v840 = vld [vmem:[%s1 + $0x1ac] sm:$0xf]
      %v841 = vld [vmem:[%s1 + $0x1b0] sm:$0xf]
      %v842 = vld [vmem:[%s1 + $0x1b4] sm:$0xf]
      %v843 = vld [vmem:[%s1 + $0x1b8] sm:$0xf]
      %v844 = vld [vmem:[%s1 + $0x1bc] sm:$0xf]
      %v845 = vld [vmem:[%s1 + $0x1c0] sm:$0xf]
      %v846 = vld [vmem:[%s1 + $0x1c4] sm:$0xf]
      %v847 = vld [vmem:[%s1 + $0x1c8] sm:$0xf]
      %v848 = vld [vmem:[%s1 + $0x1cc] sm:$0xf]
      %v849 = vld [vmem:[%s1 + $0x1d0] sm:$0xf]
      %v850 = vld [vmem:[%s1 + $0x1d4] sm:$0xf]
      %v851 = vld [vmem:[%s1 + $0x1d8] sm:$0xf]
      %v852 = vld [vmem:[%s1 + $0x1dc] sm:$0xf]
      %v853 = vld [vmem:[%s1 + $0x1e0] sm:$0xf]
      %v854 = vld [vmem:[%s1 + $0x1e4] sm:$0xf]
      %v855 = vld [vmem:[%s1 + $0x1e8] sm:$0xf]
      %v856 = vld [vmem:[%s1 + $0x1ec] sm:$0xf]
      %v857 = vld [vmem:[%s1 + $0x1f0] sm:$0xf]
      %v858 = vld [vmem:[%s1 + $0x1f4] sm:$0xf]
      %v859 = vld [vmem:[%s1 + $0x1f8] sm:$0xf]
      %v860 = vld [vmem:[%s1 + $0x1fc] sm:$0xf]
      %v893 = vunpack.c.l.b16 %v829
      %v894 = vunpack.c.l.b16 %v830
      %v895 = vunpack.c.l.b16 %v831
      %v896 = vunpack.c.l.b16 %v832
      %v897 = vunpack.c.l.b16 %v833
      %v898 = vunpack.c.l.b16 %v834
      %v899 = vunpack.c.l.b16 %v835
      %v900 = vunpack.c.l.b16 %v836
      %v901 = vunpack.c.l.b16 %v837
      %v902 = vunpack.c.l.b16 %v838
      %v903 = vunpack.c.l.b16 %v839
      %v904 = vunpack.c.l.b16 %v840
      %v905 = vunpack.c.l.b16 %v841
      %v906 = vunpack.c.l.b16 %v842
      %v907 = vunpack.c.l.b16 %v843
      %v908 = vunpack.c.l.b16 %v844
      %v909 = vunpack.c.l.b16 %v845
      %v910 = vunpack.c.l.b16 %v846
      %v911 = vunpack.c.l.b16 %v847
      %v912 = vunpack.c.l.b16 %v848
      %v913 = vunpack.c.l.b16 %v849
      %v914 = vunpack.c.l.b16 %v850
      %v915 = vunpack.c.l.b16 %v851
      %v916 = vunpack.c.l.b16 %v852
      %v917 = vunpack.c.l.b16 %v853
      %v918 = vunpack.c.l.b16 %v854
      %v919 = vunpack.c.l.b16 %v855
      %v920 = vunpack.c.l.b16 %v856
      %v921 = vunpack.c.l.b16 %v857
      %v922 = vunpack.c.l.b16 %v858
      %v923 = vunpack.c.l.b16 %v859
      %v924 = vunpack.c.l.b16 %v860
      %v925 = vpack.c.b16 %v894, %v893
      %v926 = vpack.c.b16 %v896, %v895
      %v927 = vpack.c.b16 %v898, %v897
      %v928 = vpack.c.b16 %v900, %v899
      %v929 = vpack.c.b16 %v902, %v901
      %v930 = vpack.c.b16 %v904, %v903
      %v931 = vpack.c.b16 %v906, %v905
      %v932 = vpack.c.b16 %v908, %v907
      %v933 = vpack.c.b16 %v910, %v909
      %v934 = vpack.c.b16 %v912, %v911
      %v935 = vpack.c.b16 %v914, %v913
      %v936 = vpack.c.b16 %v916, %v915
      %v937 = vpack.c.b16 %v918, %v917
      %v938 = vpack.c.b16 %v920, %v919
      %v939 = vpack.c.b16 %v922, %v921
      %v940 = vpack.c.b16 %v924, %v923
      %957 = vmatprep.subr.bf16.mxu0 0
      %958 = vmatpush1.bf16.msra.mxu0 %v925
      %959 = vmatprep.subr.bf16.mxu0 0
      %960 = vmatpush1.bf16.msra.mxu0 %v926
      %961 = vmatprep.subr.bf16.mxu0 0
      %962 = vmatpush1.bf16.msra.mxu0 %v927
      %963 = vmatprep.subr.bf16.mxu0 0
      %964 = vmatpush1.bf16.msra.mxu0 %v928
      %965 = vmatprep.subr.bf16.mxu0 0
      %966 = vmatpush1.bf16.msra.mxu0 %v929
      %967 = vmatprep.subr.bf16.mxu0 0
      %968 = vmatpush1.bf16.msra.mxu0 %v930
      %969 = vmatprep.subr.bf16.mxu0 0
      %970 = vmatpush1.bf16.msra.mxu0 %v931
      %971 = vmatprep.subr.bf16.mxu0 0
      %972 = vmatpush1.bf16.msra.mxu0 %v932
      %973 = vmatprep.subr.bf16.mxu0 0
      %974 = vmatpush1.bf16.msra.mxu0 %v933
      %975 = vmatprep.subr.bf16.mxu0 0
      %976 = vmatpush1.bf16.msra.mxu0 %v934
      %977 = vmatprep.subr.bf16.mxu0 0
      %978 = vmatpush1.bf16.msra.mxu0 %v935
      %979 = vmatprep.subr.bf16.mxu0 0
      %980 = vmatpush1.bf16.msra.mxu0 %v936
      %981 = vmatprep.subr.bf16.mxu0 0
      %982 = vmatpush1.bf16.msra.mxu0 %v937
      %983 = vmatprep.subr.bf16.mxu0 0
      %984 = vmatpush1.bf16.msra.mxu0 %v938
      %985 = vmatprep.subr.bf16.mxu0 0
      %986 = vmatpush1.bf16.msra.mxu0 %v939
      %987 = vmatprep.subr.bf16.mxu0 0
      %988 = vmatpush1.bf16.msra.mxu0 %v940
      %989 = vmatprep.mubr.bf16.mxu0 %v292
      %990 = vmatmul.mubr.bf16.gmra.mrb[0].mxu0 %v291
      %v991 = vpop.f32.mrb[0].mxu0
      %v992 = vadd.f32 0.0, %v991
      %v993 = vpop.f32.mrb[0].mxu0
      %v994 = vpop.f32.mrb[0].mxu0
      %v995 = vadd.f32 0.0, %v994
      %v996 = vpop.f32.mrb[0].mxu0
      %997 = vmatprep.mubr.bf16.mxu0 %v294
      %998 = vmatmul.mubr.bf16.gmra.mrb[0].mxu0 %v293
      %v999 = vpop.f32.mrb[0].mxu0
      %v1000 = vadd.f32 0.0, %v999
      %v1001 = vpop.f32.mrb[0].mxu0
      %v1002 = vpop.f32.mrb[0].mxu0
      %v1003 = vadd.f32 0.0, %v1002
      %v1004 = vpop.f32.mrb[0].mxu0
      %1005 = vdwg.mxu0
      %vm1010 = vcmask 1041408
      %v1011 = vrot.slane %v992, 6
      %v1012 = vrot.slane %v995, 6
      %v1013 = vsel %vm1010, %v1011, %v1012
      %v1014 = vrot.slane %v1000, 6
      %v1015 = vsel %vm1010, %v1012, %v1014
      %v1016 = vrot.slane %v1003, 6
      %v1017 = vsel %vm1010, %v1014, %v1016
      %v1021 = vadd.f32 %v826, %v1013
      %v1022 = vadd.f32 %v827, %v1015
      %v1023 = vadd.f32 %v828, %v1017
      %p1024 = scmp.eq.s32.totalorder %s20, 0
      // Predicated region
      $region41: #{patcher_forward.3} parent=39 // pred_check
        %p1025 = pneg %p1024
      $region42: #{patcher_forward.3} parent=39 // pred_check_branch
        %1027 = sbr.rel (%p1025) target = $region44
      $region43: #{patcher_forward.3} parent=39 // pred_region
        %p1028 = scmp.eq.s32.totalorder %s21, 0
        // Predicated region
        $region45: #{patcher_forward.3} parent=43 // pred_check
          %p1029 = pneg %p1028
        $region46: #{patcher_forward.3} parent=43 // pred_check_branch
          %1031 = sbr.rel (%p1029) target = $region48
        $region47: #{patcher_forward.3} parent=43 // pred_region
          %1032 = vst [vmem:[#allocation2] sm:$0x1] 0.0
          %1033 = vst [vmem:[#allocation3] sm:$0x1] 0.0
        $region48: #{patcher_forward.3} parent=43 // pred_fallthru
          _
        %v1034 = vld [vmem:[%s4] sm:$0xff]
        %v1035 = vld [vmem:[%s4 + $0x8] sm:$0xff]
        %v1036 = vld [vmem:[%s4 + $0x10] sm:$0xf]
        %1038 = vset.pattern.permute.xlu0 0
        %1039 = vperm.xlu0 %1038, %v1034
        %v1040 = vpop.permute.xlu0 %1039
        %1043 = vset.pattern.permute.xlu0 0
        %1044 = vperm.xlu0 %1043, %v1035
        %v1045 = vpop.permute.xlu0 %1044
        %1048 = vset.pattern.permute.xlu0 0
        %1049 = vperm.xlu0 %1048, %v1036
        %v1050 = vpop.permute.xlu0 %1049
        %v1052 = vmul.f32 %v1021, %v1040
        %v1053 = vmul.f32 %v1022, %v1045
        %v1054 = vmul.f32 %v1023, %v1050
        %v1055 = vld [vmem:[#allocation2] sm:$0x1]
        %v1056 = vadd.f32 %v1052, %v1053
        %vm1057 = vcmask 1043456
        %v1058 = vsel %vm1057, %v1054, 0.0
        %v1059 = vadd.f32 %v1056, %v1058
        %v1060 = vrot.slane %v1059, 4
        %v1061 = vadd.f32 %v1059, %v1060
        %v1062 = vrot.slane %v1061, 2
        %v1063 = vadd.f32 %v1061, %v1062
        %v1064 = vrot.slane %v1063, 1
        %v1065 = vadd.f32 %v1063, %v1064
        %v1066 = vadd.f32 %v1055, %v1065
        %1067 = vst [vmem:[#allocation2] sm:$0x1] %v1066
        %v1068 = vld [vmem:[#allocation3] sm:$0x1]
        %v1069 = vmul.f32 %v1052, %v1052
        %v1070 = vmul.f32 %v1053, %v1053
        %v1071 = vmul.f32 %v1054, %v1054
        %v1072 = vadd.f32 %v1069, %v1070
        %v1073 = vsel %vm1057, %v1071, 0.0
        %v1074 = vadd.f32 %v1072, %v1073
        %v1075 = vrot.slane %v1074, 4
        %v1076 = vadd.f32 %v1074, %v1075
        %v1077 = vrot.slane %v1076, 2
        %v1078 = vadd.f32 %v1076, %v1077
        %v1079 = vrot.slane %v1078, 1
        %v1080 = vadd.f32 %v1078, %v1079
        %v1081 = vadd.f32 %v1068, %v1080
        %1082 = vst [vmem:[#allocation3] sm:$0x1] %v1081
        %p1083 = scmp.eq.s32.totalorder %s21, 1
        // Predicated region
        $region49: #{patcher_forward.3} parent=43 // pred_check
          %p1084 = pneg %p1083
        $region50: #{patcher_forward.3} parent=43 // pred_check_branch
          %1086 = sbr.rel (%p1084) target = $region52
        $region51: #{patcher_forward.3} parent=43 // pred_region
          %v1087 = vld [vmem:[#allocation2] sm:$0x1]
          %v1088 = vmul.f32 %v1087, 0.03125
          %v1089 = vld [vmem:[#allocation3] sm:$0x1]
          %v1090 = vmul.f32 %v1089, 0.03125
          %v1091 = vmul.f32 %v1088, %v1088
          %v1092 = vsub.f32 %v1090, %v1091
          %v1093 = vmax.f32 %v1092, 0.0
          %v1094 = vld [vmem:[%s2] sm:$0x1]
          %v1095 = vadd.f32 %v1093, 1e-05
          %v1096 = vrsqrt.pop %v1095
          %v1097 = vmul.f32 %v1094, %v1096
          %1098 = vst [vmem:[#allocation4] sm:$0x1] %v1097
          %v1099 = vld [vmem:[%s3] sm:$0x1]
          %v1100 = vmul.f32 %v1088, %v1097
          %v1101 = vsub.f32 %v1099, %v1100
          %1102 = vst [vmem:[#allocation5] sm:$0x1] %v1101
        $region52: #{patcher_forward.3} parent=43 // pred_fallthru
          _
      $region44: #{patcher_forward.3} parent=39 // pred_fallthru
        _
      %p1103 = scmp.eq.s32.totalorder %s20, 1
      // Predicated region
      $region53: #{patcher_forward.3} parent=39 // pred_check
        %p1104 = pneg %p1103
      $region54: #{patcher_forward.3} parent=39 // pred_check_branch
        %1106 = sbr.rel (%p1104) target = $region56
      $region55: #{patcher_forward.3} parent=39 // pred_region
        %v1107 = vld [vmem:[#allocation4] sm:$0x1]
        %v1109 = vlaneseq
        %v1110 = vshrl.u32 %v1109, 7
        %v1111 = vsub.s32 0, %v1110
        %v1112 = vrot.slane %v1107, %v1111
        %v1114 = vmul.f32 %v1021, %v1112
        %v1115 = vmul.f32 %v1022, %v1112
        %v1116 = vmul.f32 %v1023, %v1112
        %v1117 = vld [vmem:[#allocation5] sm:$0x1]
        %v1119 = vlaneseq
        %v1120 = vshrl.u32 %v1119, 7
        %v1121 = vsub.s32 0, %v1120
        %v1122 = vrot.slane %v1117, %v1121
        %v1124 = vadd.f32 %v1114, %v1122
        %v1125 = vadd.f32 %v1115, %v1122
        %v1126 = vadd.f32 %v1116, %v1122
        %v1127 = vmax.f32 %v1124, 0.0
        %v1128 = vmax.f32 %v1125, 0.0
        %v1129 = vmax.f32 %v1126, 0.0
        %1130 = vst [vmem:[%s240] sm:$0xff] %v1127
        %1131 = vst [vmem:[%s240 + $0x8] sm:$0xff] %v1128
        %1132 = vst [vmem:[%s240 + $0x10] sm:$0xf] %v1129
      $region56: #{patcher_forward.3} parent=39 // pred_fallthru
        _
      %s1133 = smul.u32 %s20, %s21
      %p1134 = scmp.lt.s32.totalorder %s1133, 1
      %s1135 = scalar_select %p1134, %s1133, 1
      %s1136 = smul.addr %s1135, 3
      %s1137 = smul.addr %s1136, 8
      %s1138 = scalar_lea.vmem %s5, %s1137
      // Predicated region
      $region57: #{patcher_forward.3} parent=39 // pred_check
        %p1139 = pneg %p158
      $region58: #{patcher_forward.3} parent=39 // pred_check_branch
        %1141 = sbr.rel (%p1139) target = $region60
      $region59: #{patcher_forward.3} parent=39 // pred_region
        %s1142 = smul.u32 %s20, %s21
      $region60: #{patcher_forward.3} parent=39 // pred_fallthru
        _
    $region40: #{patcher_forward.3} parent=5 // pred_fallthru
      _
    %p1143 = scmp.le.s32.totalorder 2, %s11
    // Predicated region
    $region61: #{patcher_forward.3} parent=5 // pred_check
      %p1144 = pneg %p1143
    $region62: #{patcher_forward.3} parent=5 // pred_check_branch
      %1146 = sbr.rel (%p1144) target = $region64
    $region63: #{patcher_forward.3} parent=5 // pred_region
      %s1147 = ssub.s32 %s11, 2
      // Predicated region
      $region65: #{patcher_forward.3} parent=63 // pred_check
        %p1148 = pneg %p164
      $region66: #{patcher_forward.3} parent=63 // pred_check_branch
        %1150 = sbr.rel (%p1148) target = $region68
      $region67: #{patcher_forward.3} parent=63 // pred_region
        %s1151 = smul.u32 %s22, %s23
        %p1152 = scmp.lt.s32.totalorder %s1151, 1
        %s1153 = scalar_select %p1152, %s1151, 1
        %s1154 = smul.addr %s1153, 3
        %s1155 = smul.addr %s1154, 8
        %s1156 = scalar_lea.vmem %s5, %s1155
      $region68: #{patcher_forward.3} parent=63 // pred_fallthru
        _
    $region64: #{patcher_forward.3} parent=5 // pred_fallthru
      _
  $region6: #{patcher_forward.3} parent=0 // loop_footer
    %s15 = sadd.s32 1, %s11
  $region7: #{patcher_forward.3} parent=0 // loop_footer_branch
    %10 = sbr.rel target = $region3
  $region8: #{patcher_forward.3} parent=0 // loop_exit
    _

</llo_original>
